<compile_context>
chip_gen: v5e
topology: v5e:2x2
jax: 0.10.0
libtpu: 0.0.40
codegen_flags: <defaults>
</compile_context>

<pallas_src>
import functools
import math

import jax
import jax.numpy as jnp
from jax.experimental import pallas as pl
from jax.experimental.pallas import tpu as pltpu


HP = 128      # hidden size padded to one full TPU lane width
OUT_W = 128   # lane-dense packed output width: [action_mean | c_logits | zero pad]


# ---------------------------------------------------------------------------
# Pallas kernel: whole forward hot path (LSTM recurrence, matmuls, softmax, MLP)
# ---------------------------------------------------------------------------
def discrete_vae_kernel(
    x_ref,        # (T, NB, S)   time-major batch block of x
    xlast_ref,    # (NB, S)      x[:, -1, :] for the policy head
    c_ref,        # (NB, L)      latent c (squeezed)
    w_a1x_ref, w_a1c_ref, b_a1_ref,   # posterior input layer, split over the concat
    w_ih_ref, w_hh_ref, b_g_ref,      # LSTMCell (gate order i,f,g,o), biases pre-summed
    w_out_ref, b_out_ref,             # posterior logits head
    w1s_ref, w1c_ref, b1_ref,         # policy layer 1, split over the concat
    w2_ref, b2_ref,                   # policy layer 2
    wm_ref, bm_ref,                   # action_mean head
    out_ref,      # (NB, OUT_W)  packed lane-dense output
    *,
    temperature,
    out_width,
):
    f32 = jnp.float32
    mxu = w_ih_ref.dtype              # MXU operand dtype (f32 or bf16); accumulation stays f32

    x_tm = x_ref[...]                 # (T, NB, S)
    T, NB, S = x_tm.shape
    Hp = w_ih_ref.shape[0]
    L = w_out_ref.shape[1]
    A = wm_ref.shape[1]

    # --- DiscreteLSTMPosterior ------------------------------------------------
    # Time-invariant c contribution of the (x, c) concat: computed ONCE, not T times.
    c_contrib = (
        jnp.dot(c_ref[...].astype(mxu), w_a1c_ref[...], preferred_element_type=f32)
        + b_a1_ref[...]
    )                                                 # (NB, Hp) f32

    # Hoisted input-side matmuls: all T steps as single (T*NB)-row matmuls.
    # Time-major flatten only collapses leading dims -> no relayout.
    x_flat = x_tm.reshape(T * NB, S)
    xw = jnp.dot(x_flat.astype(mxu), w_a1x_ref[...], preferred_element_type=f32)
    a1 = jnp.tanh(xw.reshape(T, NB, Hp) + c_contrib[None, :, :]).reshape(T * NB, Hp)
    gates_x = (
        jnp.dot(a1.astype(mxu), w_ih_ref[...], preferred_element_type=f32)
        + b_g_ref[...]                                # bias broadcast once, not per step
    )                                                 # (T*NB, 4Hp) f32, time-major

    # Serial recurrence: only one matmul (h @ w_hh) per step remains on the chain.
    # Static unroll; each step reads a contiguous, sublane-aligned NB-row slab
    # (NB is a multiple of 8), so there is no per-step relayout.
    w_hh = w_hh_ref[...]
    h = jnp.zeros((NB, Hp), f32)
    cell = jnp.zeros((NB, Hp), f32)
    for t in range(T):                                # T is static -> unrolled
        g_t = gates_x[t * NB:(t + 1) * NB, :] + jnp.dot(
            h.astype(mxu), w_hh, preferred_element_type=f32)
        i_g = jax.nn.sigmoid(g_t[:, 0 * Hp:1 * Hp])   # 128-lane aligned slices (free)
        f_g = jax.nn.sigmoid(g_t[:, 1 * Hp:2 * Hp])
        g_g = jnp.tanh(g_t[:, 2 * Hp:3 * Hp])
        o_g = jax.nn.sigmoid(g_t[:, 3 * Hp:4 * Hp])
        cell = f_g * cell + i_g * g_g
        h = o_g * jnp.tanh(cell)

    logits = (
        jnp.dot(h.astype(mxu), w_out_ref[...], preferred_element_type=f32)
        + b_out_ref[...]
    )                                                 # (NB, L) f32

    # --- reparameterize (eval): softmax(logits / temperature, dim=1) ----------
    # NOTE: 1/temperature stays an in-kernel scale (one vmul on a tiny array)
    # because the *unscaled* logits must also be returned.
    y = logits * (1.0 / temperature)
    y = y - jnp.max(y, axis=1, keepdims=True)
    e = jnp.exp(y)
    probs = e * pl.reciprocal(jnp.sum(e, axis=1, keepdims=True), approx=True)

    # --- decode: DiscretePolicy(cat(x[:, -1, :], c_next, -1)) -> action_mean --
    h1 = jnp.tanh(
        jnp.dot(xlast_ref[...].astype(mxu), w1s_ref[...], preferred_element_type=f32)
        + jnp.dot(probs.astype(mxu), w1c_ref[...], preferred_element_type=f32)
        + b1_ref[...]
    )
    h2 = jnp.tanh(
        jnp.dot(h1.astype(mxu), w2_ref[...], preferred_element_type=f32) + b2_ref[...]
    )
    act = (
        jnp.dot(h2.astype(mxu), wm_ref[...], preferred_element_type=f32) + bm_ref[...]
    )                                                 # (NB, A)

    # --- lane-dense packed store: [act | logits | zeros] -----------------------
    pad = jnp.zeros((NB, out_width - A - L), f32)
    out_ref[...] = jnp.concatenate([act, logits, pad], axis=-1)


# ---------------------------------------------------------------------------
# Wrapper (plain-JAX glue: time-major layout, batch padding, BlockSpecs, unpack)
# ---------------------------------------------------------------------------
def discrete_vae_forward(x, c, kops, *, temperature=5.0, batch_block=None,
                         max_batch_block=256):
    """x: (N, T, S) f32, c: (N, 1, L) f32 -> (action_mean (N, A), c_logits (N, L)).

    batch_block=None auto-sizes the batch block: one block of up to
    `max_batch_block` rows (fills MXU rows: 128-wide MXU on v5e, 256 on v6e/v7x);
    larger batches split into multiple blocks on the "parallel" grid axis so
    v7x's two TensorCores both get work.  NB is always a multiple of 8.
    """
    N, T, S = x.shape
    c2 = c.reshape(N, -1)
    L = c2.shape[-1]
    A = kops["bm"].shape[-1]

    if batch_block is None:
        batch_block = min(((N + 7) // 8) * 8, max_batch_block)
    NB = batch_block
    n_pad = (-N) % NB
    if n_pad:
        x = jnp.concatenate([x, jnp.zeros((n_pad, T, S), x.dtype)], axis=0)
        c2 = jnp.concatenate([c2, jnp.zeros((n_pad, L), c2.dtype)], axis=0)
    Np = N + n_pad

    # Time-major activations (review item): per-step reads inside the kernel
    # become contiguous sublane blocks; x_last passed separately so the kernel
    # never slices the time axis.
    x_tm = jnp.transpose(x, (1, 0, 2))    # (T, Np, S)
    x_last = x[:, -1, :]                  # (Np, S)

    weight_order = ("w_a1x", "w_a1c", "b_a1", "w_ih", "w_hh", "b_g",
                    "w_out", "b_out", "w1s", "w1c", "b1", "w2", "b2", "wm", "bm")
    weights = [kops[k] for k in weight_order]

    in_specs = [
        pl.BlockSpec((T, NB, S), lambda i: (0, i, 0)),    # x (time-major), blocked over batch
        pl.BlockSpec((NB, S), lambda i: (i, 0)),          # x_last, blocked over batch
        pl.BlockSpec((NB, L), lambda i: (i, 0)),          # c, blocked over batch
    ] + [pl.BlockSpec(w.shape, lambda i: (0, 0)) for w in weights]  # weights resident
    # (weights have a constant index_map -> fetched once; <1 MiB resident, VMEM
    #  is a non-issue at these sizes even on v7x's 64 MiB)

    out = pl.pallas_call(
        functools.partial(discrete_vae_kernel, temperature=temperature, out_width=OUT_W),
        out_shape=jax.ShapeDtypeStruct((Np, OUT_W), jnp.float32),
        grid=(Np // NB,),
        in_specs=in_specs,
        out_specs=pl.BlockSpec((NB, OUT_W), lambda i: (i, 0)),
        compiler_params=pltpu.CompilerParams(
            dimension_semantics=("parallel",),            # batch blocks independent
        ),
    )(x_tm, x_last, c2, *weights)

    act = out[:N, :A]
    logits = out[:N, A:A + L]
    return act, logits


# ---------------------------------------------------------------------------
# Deterministic parameter init (PyTorch-Linear-style uniform bounds), logical sizes
# ---------------------------------------------------------------------------
def init_params(key, S, L, H, A):
    def lin(k, fan_in, shape):
        bound = 1.0 / math.sqrt(fan_in)
        return jax.random.uniform(k, shape, jnp.float32, -bound, bound)

    ks = jax.random.split(key, 14)
    return {
        # posterior: Linear(S+L -> H) + tanh -> LSTMCell(H) -> Linear(H -> L)
        "w_a1": lin(ks[0], S + L, (S + L, H)),
        "b_a1": lin(ks[1], S + L, (1, H)),
        "w_ih": lin(ks[2], H, (H, 4 * H)),
        "w_hh": lin(ks[3], H, (H, 4 * H)),
        "b_ih": lin(ks[4], H, (1, 4 * H)),
        "b_hh": lin(ks[5], H, (1, 4 * H)),
        "w_out": lin(ks[6], H, (H, L)),
        "b_out": lin(ks[7], H, (1, L)),
        # policy: Linear(S+L -> H) + tanh -> Linear(H -> H) + tanh -> Linear(H -> A)
        "w1": lin(ks[8], S + L, (S + L, H)),
        "b1": lin(ks[9], S + L, (1, H)),
        "w2": lin(ks[10], H, (H, H)),
        "b2": lin(ks[11], H, (1, H)),
        "wm": lin(ks[12], H, (H, A)),
        "bm": lin(ks[13], H, (1, A)),
    }


def prepare_kernel_operands(p, S, L, H, A, hp=HP, mxu_dtype=jnp.float32):
    """Split the concat-input linears, re-pack LSTM gate blocks, and zero-pad the
    hidden dimension H -> hp (=128).  Zero padding is exact: the padded hidden
    units stay identically 0 through the recurrence, so the padded model computes
    exactly the same outputs as the H-sized model.

    mxu_dtype: dtype for the MXU weight operands (jnp.bfloat16 runs the matmuls at
    native MXU rate on v6e/v7x and halves weight VMEM/DMA; accumulation stays f32).
    Biases remain f32 (added to the f32 accumulator, never fed to the MXU).
    """
    assert H <= hp

    def pad2(m, shape):
        out = jnp.zeros(shape, jnp.float32)
        return out.at[: m.shape[0], : m.shape[1]].set(m)

    def pad_gates(m, rows):
        # (r, 4H) -> (rows, 4*hp): gate g's block is re-placed at column g*hp.
        out = jnp.zeros((rows, 4 * hp), jnp.float32)
        r = m.shape[0]
        for g in range(4):
            out = out.at[:r, g * hp:g * hp + H].set(m[:, g * H:(g + 1) * H])
        return out

    kops = {
        "w_a1x": pad2(p["w_a1"][:S], (S, hp)),
        "w_a1c": pad2(p["w_a1"][S:], (L, hp)),
        "b_a1": pad2(p["b_a1"], (1, hp)),
        "w_ih": pad_gates(p["w_ih"], hp),
        "w_hh": pad_gates(p["w_hh"], hp),
        "b_g": pad_gates(p["b_ih"] + p["b_hh"], 1),
        "w_out": pad2(p["w_out"], (hp, L)),
        "b_out": p["b_out"],
        "w1s": pad2(p["w1"][:S], (S, hp)),
        "w1c": pad2(p["w1"][S:], (L, hp)),
        "b1": pad2(p["b1"], (1, hp)),
        "w2": pad2(p["w2"], (hp, hp)),
        "b2": pad2(p["b2"], (1, hp)),
        "wm": pad2(p["wm"], (hp, A)),
        "bm": p["bm"],
    }
    mxu_keys = ("w_a1x", "w_a1c", "w_ih", "w_hh", "w_out", "w1s", "w1c", "w2", "wm")
    return {k: (v.astype(mxu_dtype) if k in mxu_keys else v) for k, v in kops.items()}


# ---------------------------------------------------------------------------
# Pure-JAX reference (same math, logical sizes, f32) for a sanity check
# ---------------------------------------------------------------------------
def reference_forward(x, c, p, temperature=5.0):
    N, T, S = x.shape
    c2 = c.reshape(N, -1)
    L = c2.shape[-1]
    H = p["w_ih"].shape[0]
    post_in = jnp.concatenate(
        [x, jnp.broadcast_to(c2[:, None, :], (N, T, L))], axis=-1)
    h = jnp.zeros((N, H), jnp.float32)
    cell = jnp.zeros((N, H), jnp.float32)
    bias = p["b_ih"] + p["b_hh"]
    for t in range(T):
        a1 = jnp.tanh(post_in[:, t, :] @ p["w_a1"] + p["b_a1"])
        g = a1 @ p["w_ih"] + h @ p["w_hh"] + bias
        i_g = jax.nn.sigmoid(g[:, :H])
        f_g = jax.nn.sigmoid(g[:, H:2 * H])
        g_g = jnp.tanh(g[:, 2 * H:3 * H])
        o_g = jax.nn.sigmoid(g[:, 3 * H:])
        cell = f_g * cell + i_g * g_g
        h = o_g * jnp.tanh(cell)
    logits = h @ p["w_out"] + p["b_out"]
    probs = jax.nn.softmax(logits / temperature, axis=1)
    xin = jnp.concatenate([x[:, -1, :], probs], axis=-1)
    h1 = jnp.tanh(xin @ p["w1"] + p["b1"])
    h2 = jnp.tanh(h1 @ p["w2"] + p["b2"])
    act = h2 @ p["wm"] + p["bm"]
    return act, logits


if __name__ == "__main__":
    # Shapes implied by the module's forward():
    #   posterior_state_size S=4, posterior_latent_size L=4, hidden_size H=32,
    #   policy_output_size A=2, seq T=8, batch N=8 (fills the 8 vreg sublanes).
    N, T, S, L, H, A = 8, 8, 4, 4, 32, 2
    TEMPERATURE = 5.0

    key = jax.random.PRNGKey(0)
    kx, kc, kp = jax.random.split(key, 3)
    x = jax.random.normal(kx, (N, T, S), jnp.float32)
    c = jax.random.normal(kc, (N, 1, L), jnp.float32)
    params = init_params(kp, S, L, H, A)
    ref_act, ref_logits = reference_forward(x, c, params, temperature=TEMPERATURE)

    # ---- f32 MXU operands: tight parity check against the f32 reference ------
    kops32 = prepare_kernel_operands(params, S, L, H, A, mxu_dtype=jnp.float32)
    act, logits = discrete_vae_forward(x, c, kops32, temperature=TEMPERATURE)
    act = jax.block_until_ready(act)
    logits = jax.block_until_ready(logits)
    assert act.shape == (N, A) and logits.shape == (N, L)
    assert jnp.allclose(logits, ref_logits, rtol=2e-4, atol=2e-4), \
        float(jnp.max(jnp.abs(logits - ref_logits)))
    # slightly looser on the action path: softmax uses the EUP approx reciprocal
    assert jnp.allclose(act, ref_act, rtol=2e-3, atol=2e-3), \
        float(jnp.max(jnp.abs(act - ref_act)))

    # ---- bf16 MXU operands (f32 accumulation): the performance configuration -
    # Expected error envelope from bf16 operand rounding through the T-step
    # recurrence is ~1e-2; checked against the f32 reference with a loose bound.
    kops16 = prepare_kernel_operands(params, S, L, H, A, mxu_dtype=jnp.bfloat16)
    act16, logits16 = discrete_vae_forward(x, c, kops16, temperature=TEMPERATURE)
    act16 = jax.block_until_ready(act16)
    logits16 = jax.block_until_ready(logits16)
    assert act16.shape == (N, A) and logits16.shape == (N, L)
    assert jnp.allclose(logits16, ref_logits, rtol=1e-1, atol=1e-1), \
        float(jnp.max(jnp.abs(logits16 - ref_logits)))
    assert jnp.allclose(act16, ref_act, rtol=1e-1, atol=1e-1), \
        float(jnp.max(jnp.abs(act16 - ref_act)))

    print("KERNEL_OK")
</pallas_src>

<mosaic_0001>
module attributes {stable_mosaic.version = 11 : i64} {
  func.func @discrete_vae_kernel(%arg0: i32, %arg1: memref<8x8x4xf32, #tpu.memory_space<vmem>>, %arg2: memref<8x4xf32, #tpu.memory_space<vmem>>, %arg3: memref<8x4xf32, #tpu.memory_space<vmem>>, %arg4: memref<4x128xf32, #tpu.memory_space<vmem>>, %arg5: memref<4x128xf32, #tpu.memory_space<vmem>>, %arg6: memref<1x128xf32, #tpu.memory_space<vmem>>, %arg7: memref<128x512xf32, #tpu.memory_space<vmem>>, %arg8: memref<128x512xf32, #tpu.memory_space<vmem>>, %arg9: memref<1x512xf32, #tpu.memory_space<vmem>>, %arg10: memref<128x4xf32, #tpu.memory_space<vmem>>, %arg11: memref<1x4xf32, #tpu.memory_space<vmem>>, %arg12: memref<4x128xf32, #tpu.memory_space<vmem>>, %arg13: memref<4x128xf32, #tpu.memory_space<vmem>>, %arg14: memref<1x128xf32, #tpu.memory_space<vmem>>, %arg15: memref<128x128xf32, #tpu.memory_space<vmem>>, %arg16: memref<1x128xf32, #tpu.memory_space<vmem>>, %arg17: memref<128x2xf32, #tpu.memory_space<vmem>>, %arg18: memref<1x2xf32, #tpu.memory_space<vmem>>, %arg19: memref<8x128xf32, #tpu.memory_space<vmem>>) attributes {dimension_semantics = [#tpu.dimension_semantics<parallel>], iteration_bounds = array<i64: 1>, scalar_prefetch = 0 : i64, scratch_operands = 0 : i64, tpu.core_type = #tpu.core_type<tc>, window_params = [{transform_indices = @transform_0, window_bounds = array<i64: 8, 8, 4>}, {transform_indices = @transform_1, window_bounds = array<i64: 8, 4>}, {transform_indices = @transform_2, window_bounds = array<i64: 8, 4>}, {pipeline_mode = #tpu.pipeline_mode<synchronous>, transform_indices = @transform_3, window_bounds = array<i64: 4, 128>}, {pipeline_mode = #tpu.pipeline_mode<synchronous>, transform_indices = @transform_4, window_bounds = array<i64: 4, 128>}, {pipeline_mode = #tpu.pipeline_mode<synchronous>, transform_indices = @transform_5, window_bounds = array<i64: 1, 128>}, {pipeline_mode = #tpu.pipeline_mode<synchronous>, transform_indices = @transform_6, window_bounds = array<i64: 128, 512>}, {pipeline_mode = #tpu.pipeline_mode<synchronous>, transform_indices = @transform_7, window_bounds = array<i64: 128, 512>}, {pipeline_mode = #tpu.pipeline_mode<synchronous>, transform_indices = @transform_8, window_bounds = array<i64: 1, 512>}, {pipeline_mode = #tpu.pipeline_mode<synchronous>, transform_indices = @transform_9, window_bounds = array<i64: 128, 4>}, {pipeline_mode = #tpu.pipeline_mode<synchronous>, transform_indices = @transform_10, window_bounds = array<i64: 1, 4>}, {pipeline_mode = #tpu.pipeline_mode<synchronous>, transform_indices = @transform_11, window_bounds = array<i64: 4, 128>}, {pipeline_mode = #tpu.pipeline_mode<synchronous>, transform_indices = @transform_12, window_bounds = array<i64: 4, 128>}, {pipeline_mode = #tpu.pipeline_mode<synchronous>, transform_indices = @transform_13, window_bounds = array<i64: 1, 128>}, {pipeline_mode = #tpu.pipeline_mode<synchronous>, transform_indices = @transform_14, window_bounds = array<i64: 128, 128>}, {pipeline_mode = #tpu.pipeline_mode<synchronous>, transform_indices = @transform_15, window_bounds = array<i64: 1, 128>}, {pipeline_mode = #tpu.pipeline_mode<synchronous>, transform_indices = @transform_16, window_bounds = array<i64: 128, 2>}, {pipeline_mode = #tpu.pipeline_mode<synchronous>, transform_indices = @transform_17, window_bounds = array<i64: 1, 2>}, {transform_indices = @transform_18, window_bounds = array<i64: 8, 128>}]} {
    %c0 = arith.constant 0 : index
    %c0_0 = arith.constant 0 : index
    %c0_1 = arith.constant 0 : index
    %0 = vector.load %arg1[%c0, %c0_0, %c0_1] : memref<8x8x4xf32, #tpu.memory_space<vmem>>, vector<8x8x4xf32>
    %c0_2 = arith.constant 0 : index
    %c0_3 = arith.constant 0 : index
    %1 = vector.load %arg3[%c0_2, %c0_3] : memref<8x4xf32, #tpu.memory_space<vmem>>, vector<8x4xf32>
    %c0_4 = arith.constant 0 : index
    %c0_5 = arith.constant 0 : index
    %2 = vector.load %arg5[%c0_4, %c0_5] : memref<4x128xf32, #tpu.memory_space<vmem>>, vector<4x128xf32>
    %cst = arith.constant dense<0.000000e+00> : vector<8x128xf32>
    %3 = tpu.matmul %1, %2, %cst {dimension_numbers = #tpu.dot_dimension_numbers<[1], [0], [0], [1], [0, 0, 1, 1], [], []>} : vector<8x4xf32>, vector<4x128xf32>, vector<8x128xf32> -> vector<8x128xf32>
    %c0_6 = arith.constant 0 : index
    %c0_7 = arith.constant 0 : index
    %4 = vector.load %arg6[%c0_6, %c0_7] : memref<1x128xf32, #tpu.memory_space<vmem>>, vector<1x128xf32>
    %5 = vector.broadcast %4 : vector<1x128xf32> to vector<8x128xf32>
    %6 = arith.addf %3, %5 : vector<8x128xf32>
    %7 = vector.shape_cast %0 : vector<8x8x4xf32> to vector<64x4xf32>
    %c0_8 = arith.constant 0 : index
    %c0_9 = arith.constant 0 : index
    %8 = vector.load %arg4[%c0_8, %c0_9] : memref<4x128xf32, #tpu.memory_space<vmem>>, vector<4x128xf32>
    %cst_10 = arith.constant dense<0.000000e+00> : vector<64x128xf32>
    %9 = tpu.matmul %7, %8, %cst_10 {dimension_numbers = #tpu.dot_dimension_numbers<[1], [0], [0], [1], [0, 0, 1, 1], [], []>} : vector<64x4xf32>, vector<4x128xf32>, vector<64x128xf32> -> vector<64x128xf32>
    %10 = vector.shape_cast %9 : vector<64x128xf32> to vector<8x8x128xf32>
    %11 = vector.shape_cast %6 : vector<8x128xf32> to vector<1x8x128xf32>
    %12 = vector.broadcast %11 : vector<1x8x128xf32> to vector<8x8x128xf32>
    %13 = arith.addf %10, %12 : vector<8x8x128xf32>
    %14 = math.tanh %13 : vector<8x8x128xf32>
    %15 = vector.shape_cast %14 : vector<8x8x128xf32> to vector<64x128xf32>
    %c0_11 = arith.constant 0 : index
    %c0_12 = arith.constant 0 : index
    %16 = vector.load %arg7[%c0_11, %c0_12] : memref<128x512xf32, #tpu.memory_space<vmem>>, vector<128x512xf32>
    %cst_13 = arith.constant dense<0.000000e+00> : vector<64x512xf32>
    %17 = tpu.matmul %15, %16, %cst_13 {dimension_numbers = #tpu.dot_dimension_numbers<[1], [0], [0], [1], [0, 0, 1, 1], [], []>} : vector<64x128xf32>, vector<128x512xf32>, vector<64x512xf32> -> vector<64x512xf32>
    %c0_14 = arith.constant 0 : index
    %c0_15 = arith.constant 0 : index
    %18 = vector.load %arg9[%c0_14, %c0_15] : memref<1x512xf32, #tpu.memory_space<vmem>>, vector<1x512xf32>
    %19 = vector.broadcast %18 : vector<1x512xf32> to vector<64x512xf32>
    %20 = arith.addf %17, %19 : vector<64x512xf32>
    %c0_16 = arith.constant 0 : index
    %c0_17 = arith.constant 0 : index
    %21 = vector.load %arg8[%c0_16, %c0_17] : memref<128x512xf32, #tpu.memory_space<vmem>>, vector<128x512xf32>
    %cst_18 = arith.constant 0.000000e+00 : f32
    %22 = vector.broadcast %cst_18 : f32 to vector<8x128xf32>
    %cst_19 = arith.constant 0.000000e+00 : f32
    %23 = vector.broadcast %cst_19 : f32 to vector<8x128xf32>
    %24 = vector.extract_strided_slice %20 {offsets = [0, 0], sizes = [8, 512], strides = [1, 1]} : vector<64x512xf32> to vector<8x512xf32>
    %cst_20 = arith.constant dense<0.000000e+00> : vector<8x512xf32>
    %25 = tpu.matmul %22, %21, %cst_20 {dimension_numbers = #tpu.dot_dimension_numbers<[1], [0], [0], [1], [0, 0, 1, 1], [], []>} : vector<8x128xf32>, vector<128x512xf32>, vector<8x512xf32> -> vector<8x512xf32>
    %26 = arith.addf %24, %25 : vector<8x512xf32>
    %27 = vector.extract_strided_slice %26 {offsets = [0, 0], sizes = [8, 128], strides = [1, 1]} : vector<8x512xf32> to vector<8x128xf32>
    %28 = arith.negf %27 : vector<8x128xf32>
    %29 = math.exp %28 : vector<8x128xf32>
    %cst_21 = arith.constant 1.000000e+00 : f32
    %30 = vector.broadcast %cst_21 : f32 to vector<8x128xf32>
    %31 = arith.addf %30, %29 : vector<8x128xf32>
    %32 = arith.divf %30, %31 : vector<8x128xf32>
    %33 = vector.extract_strided_slice %26 {offsets = [0, 128], sizes = [8, 128], strides = [1, 1]} : vector<8x512xf32> to vector<8x128xf32>
    %34 = arith.negf %33 : vector<8x128xf32>
    %35 = math.exp %34 : vector<8x128xf32>
    %cst_22 = arith.constant 1.000000e+00 : f32
    %36 = vector.broadcast %cst_22 : f32 to vector<8x128xf32>
    %37 = arith.addf %36, %35 : vector<8x128xf32>
    %38 = arith.divf %36, %37 : vector<8x128xf32>
    %39 = vector.extract_strided_slice %26 {offsets = [0, 256], sizes = [8, 128], strides = [1, 1]} : vector<8x512xf32> to vector<8x128xf32>
    %40 = math.tanh %39 : vector<8x128xf32>
    %41 = vector.extract_strided_slice %26 {offsets = [0, 384], sizes = [8, 128], strides = [1, 1]} : vector<8x512xf32> to vector<8x128xf32>
    %42 = arith.negf %41 : vector<8x128xf32>
    %43 = math.exp %42 : vector<8x128xf32>
    %cst_23 = arith.constant 1.000000e+00 : f32
    %44 = vector.broadcast %cst_23 : f32 to vector<8x128xf32>
    %45 = arith.addf %44, %43 : vector<8x128xf32>
    %46 = arith.divf %44, %45 : vector<8x128xf32>
    %47 = arith.mulf %38, %23 : vector<8x128xf32>
    %48 = arith.mulf %32, %40 : vector<8x128xf32>
    %49 = arith.addf %47, %48 : vector<8x128xf32>
    %50 = math.tanh %49 : vector<8x128xf32>
    %51 = arith.mulf %46, %50 : vector<8x128xf32>
    %52 = vector.extract_strided_slice %20 {offsets = [8, 0], sizes = [8, 512], strides = [1, 1]} : vector<64x512xf32> to vector<8x512xf32>
    %cst_24 = arith.constant dense<0.000000e+00> : vector<8x512xf32>
    %53 = tpu.matmul %51, %21, %cst_24 {dimension_numbers = #tpu.dot_dimension_numbers<[1], [0], [0], [1], [0, 0, 1, 1], [], []>} : vector<8x128xf32>, vector<128x512xf32>, vector<8x512xf32> -> vector<8x512xf32>
    %54 = arith.addf %52, %53 : vector<8x512xf32>
    %55 = vector.extract_strided_slice %54 {offsets = [0, 0], sizes = [8, 128], strides = [1, 1]} : vector<8x512xf32> to vector<8x128xf32>
    %56 = arith.negf %55 : vector<8x128xf32>
    %57 = math.exp %56 : vector<8x128xf32>
    %cst_25 = arith.constant 1.000000e+00 : f32
    %58 = vector.broadcast %cst_25 : f32 to vector<8x128xf32>
    %59 = arith.addf %58, %57 : vector<8x128xf32>
    %60 = arith.divf %58, %59 : vector<8x128xf32>
    %61 = vector.extract_strided_slice %54 {offsets = [0, 128], sizes = [8, 128], strides = [1, 1]} : vector<8x512xf32> to vector<8x128xf32>
    %62 = arith.negf %61 : vector<8x128xf32>
    %63 = math.exp %62 : vector<8x128xf32>
    %cst_26 = arith.constant 1.000000e+00 : f32
    %64 = vector.broadcast %cst_26 : f32 to vector<8x128xf32>
    %65 = arith.addf %64, %63 : vector<8x128xf32>
    %66 = arith.divf %64, %65 : vector<8x128xf32>
    %67 = vector.extract_strided_slice %54 {offsets = [0, 256], sizes = [8, 128], strides = [1, 1]} : vector<8x512xf32> to vector<8x128xf32>
    %68 = math.tanh %67 : vector<8x128xf32>
    %69 = vector.extract_strided_slice %54 {offsets = [0, 384], sizes = [8, 128], strides = [1, 1]} : vector<8x512xf32> to vector<8x128xf32>
    %70 = arith.negf %69 : vector<8x128xf32>
    %71 = math.exp %70 : vector<8x128xf32>
    %cst_27 = arith.constant 1.000000e+00 : f32
    %72 = vector.broadcast %cst_27 : f32 to vector<8x128xf32>
    %73 = arith.addf %72, %71 : vector<8x128xf32>
    %74 = arith.divf %72, %73 : vector<8x128xf32>
    %75 = arith.mulf %66, %49 : vector<8x128xf32>
    %76 = arith.mulf %60, %68 : vector<8x128xf32>
    %77 = arith.addf %75, %76 : vector<8x128xf32>
    %78 = math.tanh %77 : vector<8x128xf32>
    %79 = arith.mulf %74, %78 : vector<8x128xf32>
    %80 = vector.extract_strided_slice %20 {offsets = [16, 0], sizes = [8, 512], strides = [1, 1]} : vector<64x512xf32> to vector<8x512xf32>
    %cst_28 = arith.constant dense<0.000000e+00> : vector<8x512xf32>
    %81 = tpu.matmul %79, %21, %cst_28 {dimension_numbers = #tpu.dot_dimension_numbers<[1], [0], [0], [1], [0, 0, 1, 1], [], []>} : vector<8x128xf32>, vector<128x512xf32>, vector<8x512xf32> -> vector<8x512xf32>
    %82 = arith.addf %80, %81 : vector<8x512xf32>
    %83 = vector.extract_strided_slice %82 {offsets = [0, 0], sizes = [8, 128], strides = [1, 1]} : vector<8x512xf32> to vector<8x128xf32>
    %84 = arith.negf %83 : vector<8x128xf32>
    %85 = math.exp %84 : vector<8x128xf32>
    %cst_29 = arith.constant 1.000000e+00 : f32
    %86 = vector.broadcast %cst_29 : f32 to vector<8x128xf32>
    %87 = arith.addf %86, %85 : vector<8x128xf32>
    %88 = arith.divf %86, %87 : vector<8x128xf32>
    %89 = vector.extract_strided_slice %82 {offsets = [0, 128], sizes = [8, 128], strides = [1, 1]} : vector<8x512xf32> to vector<8x128xf32>
    %90 = arith.negf %89 : vector<8x128xf32>
    %91 = math.exp %90 : vector<8x128xf32>
    %cst_30 = arith.constant 1.000000e+00 : f32
    %92 = vector.broadcast %cst_30 : f32 to vector<8x128xf32>
    %93 = arith.addf %92, %91 : vector<8x128xf32>
    %94 = arith.divf %92, %93 : vector<8x128xf32>
    %95 = vector.extract_strided_slice %82 {offsets = [0, 256], sizes = [8, 128], strides = [1, 1]} : vector<8x512xf32> to vector<8x128xf32>
    %96 = math.tanh %95 : vector<8x128xf32>
    %97 = vector.extract_strided_slice %82 {offsets = [0, 384], sizes = [8, 128], strides = [1, 1]} : vector<8x512xf32> to vector<8x128xf32>
    %98 = arith.negf %97 : vector<8x128xf32>
    %99 = math.exp %98 : vector<8x128xf32>
    %cst_31 = arith.constant 1.000000e+00 : f32
    %100 = vector.broadcast %cst_31 : f32 to vector<8x128xf32>
    %101 = arith.addf %100, %99 : vector<8x128xf32>
    %102 = arith.divf %100, %101 : vector<8x128xf32>
    %103 = arith.mulf %94, %77 : vector<8x128xf32>
    %104 = arith.mulf %88, %96 : vector<8x128xf32>
    %105 = arith.addf %103, %104 : vector<8x128xf32>
    %106 = math.tanh %105 : vector<8x128xf32>
    %107 = arith.mulf %102, %106 : vector<8x128xf32>
    %108 = vector.extract_strided_slice %20 {offsets = [24, 0], sizes = [8, 512], strides = [1, 1]} : vector<64x512xf32> to vector<8x512xf32>
    %cst_32 = arith.constant dense<0.000000e+00> : vector<8x512xf32>
    %109 = tpu.matmul %107, %21, %cst_32 {dimension_numbers = #tpu.dot_dimension_numbers<[1], [0], [0], [1], [0, 0, 1, 1], [], []>} : vector<8x128xf32>, vector<128x512xf32>, vector<8x512xf32> -> vector<8x512xf32>
    %110 = arith.addf %108, %109 : vector<8x512xf32>
    %111 = vector.extract_strided_slice %110 {offsets = [0, 0], sizes = [8, 128], strides = [1, 1]} : vector<8x512xf32> to vector<8x128xf32>
    %112 = arith.negf %111 : vector<8x128xf32>
    %113 = math.exp %112 : vector<8x128xf32>
    %cst_33 = arith.constant 1.000000e+00 : f32
    %114 = vector.broadcast %cst_33 : f32 to vector<8x128xf32>
    %115 = arith.addf %114, %113 : vector<8x128xf32>
    %116 = arith.divf %114, %115 : vector<8x128xf32>
    %117 = vector.extract_strided_slice %110 {offsets = [0, 128], sizes = [8, 128], strides = [1, 1]} : vector<8x512xf32> to vector<8x128xf32>
    %118 = arith.negf %117 : vector<8x128xf32>
    %119 = math.exp %118 : vector<8x128xf32>
    %cst_34 = arith.constant 1.000000e+00 : f32
    %120 = vector.broadcast %cst_34 : f32 to vector<8x128xf32>
    %121 = arith.addf %120, %119 : vector<8x128xf32>
    %122 = arith.divf %120, %121 : vector<8x128xf32>
    %123 = vector.extract_strided_slice %110 {offsets = [0, 256], sizes = [8, 128], strides = [1, 1]} : vector<8x512xf32> to vector<8x128xf32>
    %124 = math.tanh %123 : vector<8x128xf32>
    %125 = vector.extract_strided_slice %110 {offsets = [0, 384], sizes = [8, 128], strides = [1, 1]} : vector<8x512xf32> to vector<8x128xf32>
    %126 = arith.negf %125 : vector<8x128xf32>
    %127 = math.exp %126 : vector<8x128xf32>
    %cst_35 = arith.constant 1.000000e+00 : f32
    %128 = vector.broadcast %cst_35 : f32 to vector<8x128xf32>
    %129 = arith.addf %128, %127 : vector<8x128xf32>
    %130 = arith.divf %128, %129 : vector<8x128xf32>
    %131 = arith.mulf %122, %105 : vector<8x128xf32>
    %132 = arith.mulf %116, %124 : vector<8x128xf32>
    %133 = arith.addf %131, %132 : vector<8x128xf32>
    %134 = math.tanh %133 : vector<8x128xf32>
    %135 = arith.mulf %130, %134 : vector<8x128xf32>
    %136 = vector.extract_strided_slice %20 {offsets = [32, 0], sizes = [8, 512], strides = [1, 1]} : vector<64x512xf32> to vector<8x512xf32>
    %cst_36 = arith.constant dense<0.000000e+00> : vector<8x512xf32>
    %137 = tpu.matmul %135, %21, %cst_36 {dimension_numbers = #tpu.dot_dimension_numbers<[1], [0], [0], [1], [0, 0, 1, 1], [], []>} : vector<8x128xf32>, vector<128x512xf32>, vector<8x512xf32> -> vector<8x512xf32>
    %138 = arith.addf %136, %137 : vector<8x512xf32>
    %139 = vector.extract_strided_slice %138 {offsets = [0, 0], sizes = [8, 128], strides = [1, 1]} : vector<8x512xf32> to vector<8x128xf32>
    %140 = arith.negf %139 : vector<8x128xf32>
    %141 = math.exp %140 : vector<8x128xf32>
    %cst_37 = arith.constant 1.000000e+00 : f32
    %142 = vector.broadcast %cst_37 : f32 to vector<8x128xf32>
    %143 = arith.addf %142, %141 : vector<8x128xf32>
    %144 = arith.divf %142, %143 : vector<8x128xf32>
    %145 = vector.extract_strided_slice %138 {offsets = [0, 128], sizes = [8, 128], strides = [1, 1]} : vector<8x512xf32> to vector<8x128xf32>
    %146 = arith.negf %145 : vector<8x128xf32>
    %147 = math.exp %146 : vector<8x128xf32>
    %cst_38 = arith.constant 1.000000e+00 : f32
    %148 = vector.broadcast %cst_38 : f32 to vector<8x128xf32>
    %149 = arith.addf %148, %147 : vector<8x128xf32>
    %150 = arith.divf %148, %149 : vector<8x128xf32>
    %151 = vector.extract_strided_slice %138 {offsets = [0, 256], sizes = [8, 128], strides = [1, 1]} : vector<8x512xf32> to vector<8x128xf32>
    %152 = math.tanh %151 : vector<8x128xf32>
    %153 = vector.extract_strided_slice %138 {offsets = [0, 384], sizes = [8, 128], strides = [1, 1]} : vector<8x512xf32> to vector<8x128xf32>
    %154 = arith.negf %153 : vector<8x128xf32>
    %155 = math.exp %154 : vector<8x128xf32>
    %cst_39 = arith.constant 1.000000e+00 : f32
    %156 = vector.broadcast %cst_39 : f32 to vector<8x128xf32>
    %157 = arith.addf %156, %155 : vector<8x128xf32>
    %158 = arith.divf %156, %157 : vector<8x128xf32>
    %159 = arith.mulf %150, %133 : vector<8x128xf32>
    %160 = arith.mulf %144, %152 : vector<8x128xf32>
    %161 = arith.addf %159, %160 : vector<8x128xf32>
    %162 = math.tanh %161 : vector<8x128xf32>
    %163 = arith.mulf %158, %162 : vector<8x128xf32>
    %164 = vector.extract_strided_slice %20 {offsets = [40, 0], sizes = [8, 512], strides = [1, 1]} : vector<64x512xf32> to vector<8x512xf32>
    %cst_40 = arith.constant dense<0.000000e+00> : vector<8x512xf32>
    %165 = tpu.matmul %163, %21, %cst_40 {dimension_numbers = #tpu.dot_dimension_numbers<[1], [0], [0], [1], [0, 0, 1, 1], [], []>} : vector<8x128xf32>, vector<128x512xf32>, vector<8x512xf32> -> vector<8x512xf32>
    %166 = arith.addf %164, %165 : vector<8x512xf32>
    %167 = vector.extract_strided_slice %166 {offsets = [0, 0], sizes = [8, 128], strides = [1, 1]} : vector<8x512xf32> to vector<8x128xf32>
    %168 = arith.negf %167 : vector<8x128xf32>
    %169 = math.exp %168 : vector<8x128xf32>
    %cst_41 = arith.constant 1.000000e+00 : f32
    %170 = vector.broadcast %cst_41 : f32 to vector<8x128xf32>
    %171 = arith.addf %170, %169 : vector<8x128xf32>
    %172 = arith.divf %170, %171 : vector<8x128xf32>
    %173 = vector.extract_strided_slice %166 {offsets = [0, 128], sizes = [8, 128], strides = [1, 1]} : vector<8x512xf32> to vector<8x128xf32>
    %174 = arith.negf %173 : vector<8x128xf32>
    %175 = math.exp %174 : vector<8x128xf32>
    %cst_42 = arith.constant 1.000000e+00 : f32
    %176 = vector.broadcast %cst_42 : f32 to vector<8x128xf32>
    %177 = arith.addf %176, %175 : vector<8x128xf32>
    %178 = arith.divf %176, %177 : vector<8x128xf32>
    %179 = vector.extract_strided_slice %166 {offsets = [0, 256], sizes = [8, 128], strides = [1, 1]} : vector<8x512xf32> to vector<8x128xf32>
    %180 = math.tanh %179 : vector<8x128xf32>
    %181 = vector.extract_strided_slice %166 {offsets = [0, 384], sizes = [8, 128], strides = [1, 1]} : vector<8x512xf32> to vector<8x128xf32>
    %182 = arith.negf %181 : vector<8x128xf32>
    %183 = math.exp %182 : vector<8x128xf32>
    %cst_43 = arith.constant 1.000000e+00 : f32
    %184 = vector.broadcast %cst_43 : f32 to vector<8x128xf32>
    %185 = arith.addf %184, %183 : vector<8x128xf32>
    %186 = arith.divf %184, %185 : vector<8x128xf32>
    %187 = arith.mulf %178, %161 : vector<8x128xf32>
    %188 = arith.mulf %172, %180 : vector<8x128xf32>
    %189 = arith.addf %187, %188 : vector<8x128xf32>
    %190 = math.tanh %189 : vector<8x128xf32>
    %191 = arith.mulf %186, %190 : vector<8x128xf32>
    %192 = vector.extract_strided_slice %20 {offsets = [48, 0], sizes = [8, 512], strides = [1, 1]} : vector<64x512xf32> to vector<8x512xf32>
    %cst_44 = arith.constant dense<0.000000e+00> : vector<8x512xf32>
    %193 = tpu.matmul %191, %21, %cst_44 {dimension_numbers = #tpu.dot_dimension_numbers<[1], [0], [0], [1], [0, 0, 1, 1], [], []>} : vector<8x128xf32>, vector<128x512xf32>, vector<8x512xf32> -> vector<8x512xf32>
    %194 = arith.addf %192, %193 : vector<8x512xf32>
    %195 = vector.extract_strided_slice %194 {offsets = [0, 0], sizes = [8, 128], strides = [1, 1]} : vector<8x512xf32> to vector<8x128xf32>
    %196 = arith.negf %195 : vector<8x128xf32>
    %197 = math.exp %196 : vector<8x128xf32>
    %cst_45 = arith.constant 1.000000e+00 : f32
    %198 = vector.broadcast %cst_45 : f32 to vector<8x128xf32>
    %199 = arith.addf %198, %197 : vector<8x128xf32>
    %200 = arith.divf %198, %199 : vector<8x128xf32>
    %201 = vector.extract_strided_slice %194 {offsets = [0, 128], sizes = [8, 128], strides = [1, 1]} : vector<8x512xf32> to vector<8x128xf32>
    %202 = arith.negf %201 : vector<8x128xf32>
    %203 = math.exp %202 : vector<8x128xf32>
    %cst_46 = arith.constant 1.000000e+00 : f32
    %204 = vector.broadcast %cst_46 : f32 to vector<8x128xf32>
    %205 = arith.addf %204, %203 : vector<8x128xf32>
    %206 = arith.divf %204, %205 : vector<8x128xf32>
    %207 = vector.extract_strided_slice %194 {offsets = [0, 256], sizes = [8, 128], strides = [1, 1]} : vector<8x512xf32> to vector<8x128xf32>
    %208 = math.tanh %207 : vector<8x128xf32>
    %209 = vector.extract_strided_slice %194 {offsets = [0, 384], sizes = [8, 128], strides = [1, 1]} : vector<8x512xf32> to vector<8x128xf32>
    %210 = arith.negf %209 : vector<8x128xf32>
    %211 = math.exp %210 : vector<8x128xf32>
    %cst_47 = arith.constant 1.000000e+00 : f32
    %212 = vector.broadcast %cst_47 : f32 to vector<8x128xf32>
    %213 = arith.addf %212, %211 : vector<8x128xf32>
    %214 = arith.divf %212, %213 : vector<8x128xf32>
    %215 = arith.mulf %206, %189 : vector<8x128xf32>
    %216 = arith.mulf %200, %208 : vector<8x128xf32>
    %217 = arith.addf %215, %216 : vector<8x128xf32>
    %218 = math.tanh %217 : vector<8x128xf32>
    %219 = arith.mulf %214, %218 : vector<8x128xf32>
    %220 = vector.extract_strided_slice %20 {offsets = [56, 0], sizes = [8, 512], strides = [1, 1]} : vector<64x512xf32> to vector<8x512xf32>
    %cst_48 = arith.constant dense<0.000000e+00> : vector<8x512xf32>
    %221 = tpu.matmul %219, %21, %cst_48 {dimension_numbers = #tpu.dot_dimension_numbers<[1], [0], [0], [1], [0, 0, 1, 1], [], []>} : vector<8x128xf32>, vector<128x512xf32>, vector<8x512xf32> -> vector<8x512xf32>
    %222 = arith.addf %220, %221 : vector<8x512xf32>
    %223 = vector.extract_strided_slice %222 {offsets = [0, 0], sizes = [8, 128], strides = [1, 1]} : vector<8x512xf32> to vector<8x128xf32>
    %224 = arith.negf %223 : vector<8x128xf32>
    %225 = math.exp %224 : vector<8x128xf32>
    %cst_49 = arith.constant 1.000000e+00 : f32
    %226 = vector.broadcast %cst_49 : f32 to vector<8x128xf32>
    %227 = arith.addf %226, %225 : vector<8x128xf32>
    %228 = arith.divf %226, %227 : vector<8x128xf32>
    %229 = vector.extract_strided_slice %222 {offsets = [0, 128], sizes = [8, 128], strides = [1, 1]} : vector<8x512xf32> to vector<8x128xf32>
    %230 = arith.negf %229 : vector<8x128xf32>
    %231 = math.exp %230 : vector<8x128xf32>
    %cst_50 = arith.constant 1.000000e+00 : f32
    %232 = vector.broadcast %cst_50 : f32 to vector<8x128xf32>
    %233 = arith.addf %232, %231 : vector<8x128xf32>
    %234 = arith.divf %232, %233 : vector<8x128xf32>
    %235 = vector.extract_strided_slice %222 {offsets = [0, 256], sizes = [8, 128], strides = [1, 1]} : vector<8x512xf32> to vector<8x128xf32>
    %236 = math.tanh %235 : vector<8x128xf32>
    %237 = vector.extract_strided_slice %222 {offsets = [0, 384], sizes = [8, 128], strides = [1, 1]} : vector<8x512xf32> to vector<8x128xf32>
    %238 = arith.negf %237 : vector<8x128xf32>
    %239 = math.exp %238 : vector<8x128xf32>
    %cst_51 = arith.constant 1.000000e+00 : f32
    %240 = vector.broadcast %cst_51 : f32 to vector<8x128xf32>
    %241 = arith.addf %240, %239 : vector<8x128xf32>
    %242 = arith.divf %240, %241 : vector<8x128xf32>
    %243 = arith.mulf %234, %217 : vector<8x128xf32>
    %244 = arith.mulf %228, %236 : vector<8x128xf32>
    %245 = arith.addf %243, %244 : vector<8x128xf32>
    %246 = math.tanh %245 : vector<8x128xf32>
    %247 = arith.mulf %242, %246 : vector<8x128xf32>
    %c0_52 = arith.constant 0 : index
    %c0_53 = arith.constant 0 : index
    %248 = vector.load %arg10[%c0_52, %c0_53] : memref<128x4xf32, #tpu.memory_space<vmem>>, vector<128x4xf32>
    %cst_54 = arith.constant dense<0.000000e+00> : vector<8x4xf32>
    %249 = tpu.matmul %247, %248, %cst_54 {dimension_numbers = #tpu.dot_dimension_numbers<[1], [0], [0], [1], [0, 0, 1, 1], [], []>} : vector<8x128xf32>, vector<128x4xf32>, vector<8x4xf32> -> vector<8x4xf32>
    %c0_55 = arith.constant 0 : index
    %c0_56 = arith.constant 0 : index
    %250 = vector.load %arg11[%c0_55, %c0_56] : memref<1x4xf32, #tpu.memory_space<vmem>>, vector<1x4xf32>
    %251 = vector.broadcast %250 : vector<1x4xf32> to vector<8x4xf32>
    %252 = arith.addf %249, %251 : vector<8x4xf32>
    %cst_57 = arith.constant 2.000000e-01 : f32
    %253 = vector.broadcast %cst_57 : f32 to vector<8x4xf32>
    %254 = arith.mulf %252, %253 : vector<8x4xf32>
    %cst_58 = arith.constant dense<0xFF800000> : vector<8xf32>
    %255 = vector.multi_reduction <maximumf>, %254, %cst_58 [1] : vector<8x4xf32> to vector<8xf32>
    %256 = vector.shape_cast %255 : vector<8xf32> to vector<8x1xf32>
    %257 = vector.broadcast %256 : vector<8x1xf32> to vector<8x4xf32>
    %258 = arith.subf %254, %257 : vector<8x4xf32>
    %259 = math.exp %258 : vector<8x4xf32>
    %cst_59 = arith.constant dense<0.000000e+00> : vector<8xf32>
    %260 = vector.multi_reduction <add>, %259, %cst_59 [1] : vector<8x4xf32> to vector<8xf32>
    %261 = vector.shape_cast %260 : vector<8xf32> to vector<8x1xf32>
    %262 = tpu.reciprocal %261 {approx = true} : vector<8x1xf32> -> vector<8x1xf32>
    %263 = vector.broadcast %262 : vector<8x1xf32> to vector<8x4xf32>
    %264 = arith.mulf %259, %263 : vector<8x4xf32>
    %c0_60 = arith.constant 0 : index
    %c0_61 = arith.constant 0 : index
    %265 = vector.load %arg2[%c0_60, %c0_61] : memref<8x4xf32, #tpu.memory_space<vmem>>, vector<8x4xf32>
    %c0_62 = arith.constant 0 : index
    %c0_63 = arith.constant 0 : index
    %266 = vector.load %arg12[%c0_62, %c0_63] : memref<4x128xf32, #tpu.memory_space<vmem>>, vector<4x128xf32>
    %cst_64 = arith.constant dense<0.000000e+00> : vector<8x128xf32>
    %267 = tpu.matmul %265, %266, %cst_64 {dimension_numbers = #tpu.dot_dimension_numbers<[1], [0], [0], [1], [0, 0, 1, 1], [], []>} : vector<8x4xf32>, vector<4x128xf32>, vector<8x128xf32> -> vector<8x128xf32>
    %c0_65 = arith.constant 0 : index
    %c0_66 = arith.constant 0 : index
    %268 = vector.load %arg13[%c0_65, %c0_66] : memref<4x128xf32, #tpu.memory_space<vmem>>, vector<4x128xf32>
    %cst_67 = arith.constant dense<0.000000e+00> : vector<8x128xf32>
    %269 = tpu.matmul %264, %268, %cst_67 {dimension_numbers = #tpu.dot_dimension_numbers<[1], [0], [0], [1], [0, 0, 1, 1], [], []>} : vector<8x4xf32>, vector<4x128xf32>, vector<8x128xf32> -> vector<8x128xf32>
    %270 = arith.addf %267, %269 : vector<8x128xf32>
    %c0_68 = arith.constant 0 : index
    %c0_69 = arith.constant 0 : index
    %271 = vector.load %arg14[%c0_68, %c0_69] : memref<1x128xf32, #tpu.memory_space<vmem>>, vector<1x128xf32>
    %272 = vector.broadcast %271 : vector<1x128xf32> to vector<8x128xf32>
    %273 = arith.addf %270, %272 : vector<8x128xf32>
    %274 = math.tanh %273 : vector<8x128xf32>
    %c0_70 = arith.constant 0 : index
    %c0_71 = arith.constant 0 : index
    %275 = vector.load %arg15[%c0_70, %c0_71] : memref<128x128xf32, #tpu.memory_space<vmem>>, vector<128x128xf32>
    %cst_72 = arith.constant dense<0.000000e+00> : vector<8x128xf32>
    %276 = tpu.matmul %274, %275, %cst_72 {dimension_numbers = #tpu.dot_dimension_numbers<[1], [0], [0], [1], [0, 0, 1, 1], [], []>} : vector<8x128xf32>, vector<128x128xf32>, vector<8x128xf32> -> vector<8x128xf32>
    %c0_73 = arith.constant 0 : index
    %c0_74 = arith.constant 0 : index
    %277 = vector.load %arg16[%c0_73, %c0_74] : memref<1x128xf32, #tpu.memory_space<vmem>>, vector<1x128xf32>
    %278 = vector.broadcast %277 : vector<1x128xf32> to vector<8x128xf32>
    %279 = arith.addf %276, %278 : vector<8x128xf32>
    %280 = math.tanh %279 : vector<8x128xf32>
    %c0_75 = arith.constant 0 : index
    %c0_76 = arith.constant 0 : index
    %281 = vector.load %arg17[%c0_75, %c0_76] : memref<128x2xf32, #tpu.memory_space<vmem>>, vector<128x2xf32>
    %cst_77 = arith.constant dense<0.000000e+00> : vector<8x2xf32>
    %282 = tpu.matmul %280, %281, %cst_77 {dimension_numbers = #tpu.dot_dimension_numbers<[1], [0], [0], [1], [0, 0, 1, 1], [], []>} : vector<8x128xf32>, vector<128x2xf32>, vector<8x2xf32> -> vector<8x2xf32>
    %c0_78 = arith.constant 0 : index
    %c0_79 = arith.constant 0 : index
    %283 = vector.load %arg18[%c0_78, %c0_79] : memref<1x2xf32, #tpu.memory_space<vmem>>, vector<1x2xf32>
    %284 = vector.broadcast %283 : vector<1x2xf32> to vector<8x2xf32>
    %285 = arith.addf %282, %284 : vector<8x2xf32>
    %cst_80 = arith.constant 0.000000e+00 : f32
    %286 = vector.broadcast %cst_80 : f32 to vector<8x122xf32>
    %287 = tpu.concatenate %285, %252, %286 in 1 : vector<8x2xf32>, vector<8x4xf32>, vector<8x122xf32> -> vector<8x128xf32>
    %c0_81 = arith.constant 0 : index
    %c0_82 = arith.constant 0 : index
    %288 = vector.load %arg19[%c0_81, %c0_82] : memref<8x128xf32, #tpu.memory_space<vmem>>, vector<8x128xf32>
    tpu.vector_store %arg19[%c0_81, %c0_82], %287 {strides = array<i32>} : memref<8x128xf32, #tpu.memory_space<vmem>>, vector<8x128xf32>,
    return
  }
  func.func @transform_0(%arg0: i32) -> (i32, i32, i32) {
    %c0_i32 = arith.constant 0 : i32
    %c0_i32_0 = arith.constant 0 : i32
    %c0_i32_1 = arith.constant 0 : i32
    return %c0_i32, %arg0, %c0_i32_0 : i32, i32, i32
  }
  func.func @transform_1(%arg0: i32) -> (i32, i32) {
    %c0_i32 = arith.constant 0 : i32
    %c0_i32_0 = arith.constant 0 : i32
    return %arg0, %c0_i32 : i32, i32
  }
  func.func @transform_2(%arg0: i32) -> (i32, i32) {
    %c0_i32 = arith.constant 0 : i32
    %c0_i32_0 = arith.constant 0 : i32
    return %arg0, %c0_i32 : i32, i32
  }
  func.func @transform_3(%arg0: i32) -> (i32, i32) {
    %c0_i32 = arith.constant 0 : i32
    %c0_i32_0 = arith.constant 0 : i32
    %c0_i32_1 = arith.constant 0 : i32
    return %c0_i32, %c0_i32_0 : i32, i32
  }
  func.func @transform_4(%arg0: i32) -> (i32, i32) {
    %c0_i32 = arith.constant 0 : i32
    %c0_i32_0 = arith.constant 0 : i32
    %c0_i32_1 = arith.constant 0 : i32
    return %c0_i32, %c0_i32_0 : i32, i32
  }
  func.func @transform_5(%arg0: i32) -> (i32, i32) {
    %c0_i32 = arith.constant 0 : i32
    %c0_i32_0 = arith.constant 0 : i32
    %c0_i32_1 = arith.constant 0 : i32
    return %c0_i32, %c0_i32_0 : i32, i32
  }
  func.func @transform_6(%arg0: i32) -> (i32, i32) {
    %c0_i32 = arith.constant 0 : i32
    %c0_i32_0 = arith.constant 0 : i32
    %c0_i32_1 = arith.constant 0 : i32
    return %c0_i32, %c0_i32_0 : i32, i32
  }
  func.func @transform_7(%arg0: i32) -> (i32, i32) {
    %c0_i32 = arith.constant 0 : i32
    %c0_i32_0 = arith.constant 0 : i32
    %c0_i32_1 = arith.constant 0 : i32
    return %c0_i32, %c0_i32_0 : i32, i32
  }
  func.func @transform_8(%arg0: i32) -> (i32, i32) {
    %c0_i32 = arith.constant 0 : i32
    %c0_i32_0 = arith.constant 0 : i32
    %c0_i32_1 = arith.constant 0 : i32
    return %c0_i32, %c0_i32_0 : i32, i32
  }
  func.func @transform_9(%arg0: i32) -> (i32, i32) {
    %c0_i32 = arith.constant 0 : i32
    %c0_i32_0 = arith.constant 0 : i32
    %c0_i32_1 = arith.constant 0 : i32
    return %c0_i32, %c0_i32_0 : i32, i32
  }
  func.func @transform_10(%arg0: i32) -> (i32, i32) {
    %c0_i32 = arith.constant 0 : i32
    %c0_i32_0 = arith.constant 0 : i32
    %c0_i32_1 = arith.constant 0 : i32
    return %c0_i32, %c0_i32_0 : i32, i32
  }
  func.func @transform_11(%arg0: i32) -> (i32, i32) {
    %c0_i32 = arith.constant 0 : i32
    %c0_i32_0 = arith.constant 0 : i32
    %c0_i32_1 = arith.constant 0 : i32
    return %c0_i32, %c0_i32_0 : i32, i32
  }
  func.func @transform_12(%arg0: i32) -> (i32, i32) {
    %c0_i32 = arith.constant 0 : i32
    %c0_i32_0 = arith.constant 0 : i32
    %c0_i32_1 = arith.constant 0 : i32
    return %c0_i32, %c0_i32_0 : i32, i32
  }
  func.func @transform_13(%arg0: i32) -> (i32, i32) {
    %c0_i32 = arith.constant 0 : i32
    %c0_i32_0 = arith.constant 0 : i32
    %c0_i32_1 = arith.constant 0 : i32
    return %c0_i32, %c0_i32_0 : i32, i32
  }
  func.func @transform_14(%arg0: i32) -> (i32, i32) {
    %c0_i32 = arith.constant 0 : i32
    %c0_i32_0 = arith.constant 0 : i32
    %c0_i32_1 = arith.constant 0 : i32
    return %c0_i32, %c0_i32_0 : i32, i32
  }
  func.func @transform_15(%arg0: i32) -> (i32, i32) {
    %c0_i32 = arith.constant 0 : i32
    %c0_i32_0 = arith.constant 0 : i32
    %c0_i32_1 = arith.constant 0 : i32
    return %c0_i32, %c0_i32_0 : i32, i32
  }
  func.func @transform_16(%arg0: i32) -> (i32, i32) {
    %c0_i32 = arith.constant 0 : i32
    %c0_i32_0 = arith.constant 0 : i32
    %c0_i32_1 = arith.constant 0 : i32
    return %c0_i32, %c0_i32_0 : i32, i32
  }
  func.func @transform_17(%arg0: i32) -> (i32, i32) {
    %c0_i32 = arith.constant 0 : i32
    %c0_i32_0 = arith.constant 0 : i32
    %c0_i32_1 = arith.constant 0 : i32
    return %c0_i32, %c0_i32_0 : i32, i32
  }
  func.func @transform_18(%arg0: i32) -> (i32, i32) {
    %c0_i32 = arith.constant 0 : i32
    %c0_i32_0 = arith.constant 0 : i32
    return %arg0, %c0_i32 : i32, i32
  }
}

</mosaic_0001>

<llo_original>
// kernel: tpu_custom_call.1
$region0: #{tpu_custom_call.1}
  #allocation0 [shape = 'u32[]', space=smem, size = 0x4, offset = 0x4, fixed_abs, tag = 'smem constant byte address 0x4 - core index']
  #allocation1 [shape = 'u32[72,128]{1,0:T(1,128)}', space=vmem, size = 0x9000, scoped, tag = 'internal scratch']
  %s0 = inlined_call_operand.vmem [shape: f32[8,8,4], index: 0, kind: input, shape index: {}]
  %s1 = inlined_call_operand.vmem [shape: f32[8,4], index: 1, kind: input, shape index: {}]
  %s2 = inlined_call_operand.vmem [shape: f32[8,4], index: 2, kind: input, shape index: {}]
  %s3 = inlined_call_operand.vmem [shape: f32[4,128], index: 3, kind: input, shape index: {}]
  %s4 = inlined_call_operand.vmem [shape: f32[4,128], index: 4, kind: input, shape index: {}]
  %s5 = inlined_call_operand.vmem [shape: f32[1,128], index: 5, kind: input, shape index: {}]
  %s6 = inlined_call_operand.hbm [shape: f32[128,512], index: 6, kind: input, shape index: {}]
  %s7 = inlined_call_operand.hbm [shape: f32[128,512], index: 7, kind: input, shape index: {}]
  %s8 = inlined_call_operand.vmem [shape: f32[1,512], index: 8, kind: input, shape index: {}]
  %s9 = inlined_call_operand.vmem [shape: f32[128,4], index: 9, kind: input, shape index: {}]
  %s10 = inlined_call_operand.vmem [shape: f32[1,4], index: 10, kind: input, shape index: {}]
  %s11 = inlined_call_operand.vmem [shape: f32[4,128], index: 11, kind: input, shape index: {}]
  %s12 = inlined_call_operand.vmem [shape: f32[4,128], index: 12, kind: input, shape index: {}]
  %s13 = inlined_call_operand.vmem [shape: f32[1,128], index: 13, kind: input, shape index: {}]
  %s14 = inlined_call_operand.vmem [shape: f32[128,128], index: 14, kind: input, shape index: {}]
  %s15 = inlined_call_operand.vmem [shape: f32[1,128], index: 15, kind: input, shape index: {}]
  %s16 = inlined_call_operand.vmem [shape: f32[128,2], index: 16, kind: input, shape index: {}]
  %s17 = inlined_call_operand.vmem [shape: f32[1,2], index: 17, kind: input, shape index: {}]
  %s18 = inlined_call_operand.hbm [shape: f32[8,128], index: 18, kind: output, shape index: {}]
  %s19 = sld [smem:[#allocation0]]
  $region90: #{tpu_custom_call.1} parent=0
    _
  %s21 = ssub.s32 1, %s19
  %s22 = scalar_select 0, %s21, %s19
  $region1: #{tpu_custom_call.1} parent=0
    #allocation2 [shape = 'u8[262144]{0}', space=vmem, size = 0x40000, scoped, tag = 'input window, operand 6, single buffered']
    #allocation3 [shape = 's32[1]{0}', space=sflag, size = 0x4, scoped, tag = 'scoped memory for tpu_custom_call.1']
    #allocation4 [shape = 's32[1]{0}', space=sflag, size = 0x4, scoped, tag = 'scoped memory for tpu_custom_call.1']
    #allocation5 [shape = 'u8[262144]{0}', space=vmem, size = 0x40000, scoped, tag = 'input window, operand 7, single buffered']
    #allocation6 [shape = 's32[1]{0}', space=sflag, size = 0x4, scoped, tag = 'scoped memory for tpu_custom_call.1']
    #allocation7 [shape = 'u8[4096]{0}', space=vmem, size = 0x1000, scoped, tag = 'output window, operand 0, single buffered']
    %23 = vsyncpa [#allocation3], 0
    %24 = vsyncpa [#allocation6], 0
    %25 = vsyncpa [#allocation4], 0
    // Predicated region
    $region2: #{tpu_custom_call.1} parent=1 // pred_check
      _
    $region3: #{tpu_custom_call.1} parent=1 // pred_check_branch
      %27 = sbr.rel (0) target = $region5
    $region4: #{tpu_custom_call.1} parent=1 // pred_region
      _
    $region5: #{tpu_custom_call.1} parent=1 // pred_fallthru
      _
    // Predicated region
    $region6: #{tpu_custom_call.1} parent=1 // pred_check
      _
    $region7: #{tpu_custom_call.1} parent=1 // pred_check_branch
      %29 = sbr.rel (0) target = $region9
    $region8: #{tpu_custom_call.1} parent=1 // pred_region
      _
    $region9: #{tpu_custom_call.1} parent=1 // pred_fallthru
      _
    // Predicated region
    $region10: #{tpu_custom_call.1} parent=1 // pred_check
      _
    $region11: #{tpu_custom_call.1} parent=1 // pred_check_branch
      %31 = sbr.rel (0) target = $region13
    $region12: #{tpu_custom_call.1} parent=1 // pred_region
      _
    $region13: #{tpu_custom_call.1} parent=1 // pred_fallthru
      _
    // Predicated region
    $region14: #{tpu_custom_call.1} parent=1 // pred_check
      _
    $region15: #{tpu_custom_call.1} parent=1 // pred_check_branch
      %33 = sbr.rel (0) target = $region17
    $region16: #{tpu_custom_call.1} parent=1 // pred_region
      _
    $region17: #{tpu_custom_call.1} parent=1 // pred_fallthru
      _
    // Predicated region
    $region18: #{tpu_custom_call.1} parent=1 // pred_check
      _
    $region19: #{tpu_custom_call.1} parent=1 // pred_check_branch
      %35 = sbr.rel (0) target = $region21
    $region20: #{tpu_custom_call.1} parent=1 // pred_region
      _
    $region21: #{tpu_custom_call.1} parent=1 // pred_fallthru
      _
    // Predicated region
    $region22: #{tpu_custom_call.1} parent=1 // pred_check
      _
    $region23: #{tpu_custom_call.1} parent=1 // pred_check_branch
      %37 = sbr.rel (0) target = $region25
    $region24: #{tpu_custom_call.1} parent=1 // pred_region
      _
    $region25: #{tpu_custom_call.1} parent=1 // pred_fallthru
      _
    // Predicated region
    $region26: #{tpu_custom_call.1} parent=1 // pred_check
      _
    $region27: #{tpu_custom_call.1} parent=1 // pred_check_branch
      %39 = sbr.rel (0) target = $region29
    $region28: #{tpu_custom_call.1} parent=1 // pred_region
      %41 = vsyncadd [#allocation3], 0
      %s42 = sshll.u32 %s6, 4
      %s43 = int_to_ptr.hbm [resolvable:$true] %s42
      %s44 = sshll.u32 [#allocation2], 4
      %s45 = int_to_ptr.vmem [resolvable:$true] %s44
      %50 = dma.hbm_to_vmem [thread:$0]  %s43, 8192, %s45, [#allocation3], 512, 512, 32
    $region29: #{tpu_custom_call.1} parent=1 // pred_fallthru
      _
    // Predicated region
    $region30: #{tpu_custom_call.1} parent=1 // pred_check
      _
    $region31: #{tpu_custom_call.1} parent=1 // pred_check_branch
      %52 = sbr.rel (0) target = $region33
    $region32: #{tpu_custom_call.1} parent=1 // pred_region
      %54 = vsyncadd [#allocation6], 0
      %s55 = sshll.u32 %s7, 4
      %s56 = int_to_ptr.hbm [resolvable:$true] %s55
      %s57 = sshll.u32 [#allocation5], 4
      %s58 = int_to_ptr.vmem [resolvable:$true] %s57
      %63 = dma.hbm_to_vmem [thread:$0]  %s56, 8192, %s58, [#allocation6], 512, 512, 32
    $region33: #{tpu_custom_call.1} parent=1 // pred_fallthru
      _
    // Predicated region
    $region34: #{tpu_custom_call.1} parent=1 // pred_check
      _
    $region35: #{tpu_custom_call.1} parent=1 // pred_check_branch
      %65 = sbr.rel (0) target = $region37
    $region36: #{tpu_custom_call.1} parent=1 // pred_region
      _
    $region37: #{tpu_custom_call.1} parent=1 // pred_fallthru
      _
    // Predicated region
    $region38: #{tpu_custom_call.1} parent=1 // pred_check
      _
    $region39: #{tpu_custom_call.1} parent=1 // pred_check_branch
      %67 = sbr.rel (0) target = $region41
    $region40: #{tpu_custom_call.1} parent=1 // pred_region
      _
    $region41: #{tpu_custom_call.1} parent=1 // pred_fallthru
      _
    // Predicated region
    $region42: #{tpu_custom_call.1} parent=1 // pred_check
      _
    $region43: #{tpu_custom_call.1} parent=1 // pred_check_branch
      %69 = sbr.rel (0) target = $region45
    $region44: #{tpu_custom_call.1} parent=1 // pred_region
      _
    $region45: #{tpu_custom_call.1} parent=1 // pred_fallthru
      _
    // Predicated region
    $region46: #{tpu_custom_call.1} parent=1 // pred_check
      _
    $region47: #{tpu_custom_call.1} parent=1 // pred_check_branch
      %71 = sbr.rel (0) target = $region49
    $region48: #{tpu_custom_call.1} parent=1 // pred_region
      _
    $region49: #{tpu_custom_call.1} parent=1 // pred_fallthru
      _
    // Predicated region
    $region50: #{tpu_custom_call.1} parent=1 // pred_check
      _
    $region51: #{tpu_custom_call.1} parent=1 // pred_check_branch
      %73 = sbr.rel (0) target = $region53
    $region52: #{tpu_custom_call.1} parent=1 // pred_region
      _
    $region53: #{tpu_custom_call.1} parent=1 // pred_fallthru
      _
    // Predicated region
    $region54: #{tpu_custom_call.1} parent=1 // pred_check
      _
    $region55: #{tpu_custom_call.1} parent=1 // pred_check_branch
      %75 = sbr.rel (0) target = $region57
    $region56: #{tpu_custom_call.1} parent=1 // pred_region
      _
    $region57: #{tpu_custom_call.1} parent=1 // pred_fallthru
      _
    // Predicated region
    $region58: #{tpu_custom_call.1} parent=1 // pred_check
      _
    $region59: #{tpu_custom_call.1} parent=1 // pred_check_branch
      %77 = sbr.rel (0) target = $region61
    $region60: #{tpu_custom_call.1} parent=1 // pred_region
      _
    $region61: #{tpu_custom_call.1} parent=1 // pred_fallthru
      _
    // Predicated region
    $region62: #{tpu_custom_call.1} parent=1 // pred_check
      _
    $region63: #{tpu_custom_call.1} parent=1 // pred_check_branch
      %79 = sbr.rel (0) target = $region65
    $region64: #{tpu_custom_call.1} parent=1 // pred_region
      _
    $region65: #{tpu_custom_call.1} parent=1 // pred_fallthru
      _
    // Predicated region
    $region66: #{tpu_custom_call.1} parent=1 // pred_check
      _
    $region67: #{tpu_custom_call.1} parent=1 // pred_check_branch
      %81 = sbr.rel (0) target = $region69
    $region68: #{tpu_custom_call.1} parent=1 // pred_region
      _
    $region69: #{tpu_custom_call.1} parent=1 // pred_fallthru
      _
    // Predicated region
    $region70: #{tpu_custom_call.1} parent=1 // pred_check
      _
    $region71: #{tpu_custom_call.1} parent=1 // pred_check_branch
      %83 = sbr.rel (0) target = $region73
    $region72: #{tpu_custom_call.1} parent=1 // pred_region
      _
    $region73: #{tpu_custom_call.1} parent=1 // pred_fallthru
      _
    // Predicated region
    $region74: #{tpu_custom_call.1} parent=1 // pred_check
      _
    $region75: #{tpu_custom_call.1} parent=1 // pred_check_branch
      %85 = sbr.rel (0) target = $region77
    $region76: #{tpu_custom_call.1} parent=1 // pred_region
      %87 = dma.done [#allocation3], 8192
    $region77: #{tpu_custom_call.1} parent=1 // pred_fallthru
      _
    // Predicated region
    $region78: #{tpu_custom_call.1} parent=1 // pred_check
      _
    $region79: #{tpu_custom_call.1} parent=1 // pred_check_branch
      %89 = sbr.rel (0) target = $region81
    $region80: #{tpu_custom_call.1} parent=1 // pred_region
      %91 = dma.done [#allocation6], 8192
    $region81: #{tpu_custom_call.1} parent=1 // pred_fallthru
      _
    %v92 = vld [vmem:[%s0] sm:$0xff]
    %v93 = vld [vmem:[%s0 + $0x8] sm:$0xff]
    %v94 = vld [vmem:[%s0 + $0x10] sm:$0xff]
    %v95 = vld [vmem:[%s0 + $0x18] sm:$0xff]
    %v96 = vld [vmem:[%s0 + $0x20] sm:$0xff]
    %v97 = vld [vmem:[%s0 + $0x28] sm:$0xff]
    %v98 = vld [vmem:[%s0 + $0x30] sm:$0xff]
    %v99 = vld [vmem:[%s0 + $0x38] sm:$0xff]
    %v100 = vld [vmem:[%s2] sm:$0xff]
    %v101 = vld [vmem:[%s4] sm:$0xf]
    %v102 = vld [vmem:[%s5] sm:$0x1]
    %v104 = vperm.slane %v102, 0
    %vm106 = vcmask 31744
    %v108 = vsel %vm106, %v100, 0
    %vm110 = vcmask 1043456
    %v112 = vsel %vm110, %v101, 0
    %114 = vmatpush.msra.mxu0 0.0
    %115 = vmatpush.msra.mxu0 0.0
    %116 = vmatpush.msra.mxu0 0.0
    %117 = vmatpush.msra.mxu0 0.0
    %118 = vmatpush.msra.mxu0 0.0
    %119 = vmatpush.msra.mxu0 0.0
    %120 = vmatpush.msra.mxu0 0.0
    %121 = vmatpush.msra.mxu0 0.0
    %122 = vmatpush.msra.mxu0 0.0
    %123 = vmatpush.msra.mxu0 0.0
    %124 = vmatpush.msra.mxu0 0.0
    %125 = vmatpush.msra.mxu0 0.0
    %126 = vmatpush.msra.mxu0 0.0
    %127 = vmatpush.msra.mxu0 0.0
    %128 = vmatpush.msra.mxu0 0.0
    %129 = vmatpush.msra.mxu0 %v112
    %130 = vmatmul.f32.gmra.mxu0 %v108
    %v131 = vpop.f32.mrf.mxu0
    %v132 = vadd.f32 %v104, %v131
    %133 = vdwg.mxu0
    %v134 = vld [vmem:[%s3] sm:$0xf]
    %v136 = vsel %vm106, %v92, 0
    %v139 = vsel %vm106, %v93, 0
    %v142 = vsel %vm106, %v94, 0
    %v145 = vsel %vm106, %v95, 0
    %v148 = vsel %vm106, %v96, 0
    %v151 = vsel %vm106, %v97, 0
    %v154 = vsel %vm106, %v98, 0
    %v157 = vsel %vm106, %v99, 0
    %v160 = vsel %vm110, %v134, 0
    %162 = vmatpush.msra.mxu0 0.0
    %163 = vmatpush.msra.mxu0 0.0
    %164 = vmatpush.msra.mxu0 0.0
    %165 = vmatpush.msra.mxu0 0.0
    %166 = vmatpush.msra.mxu0 0.0
    %167 = vmatpush.msra.mxu0 0.0
    %168 = vmatpush.msra.mxu0 0.0
    %169 = vmatpush.msra.mxu0 0.0
    %170 = vmatpush.msra.mxu0 0.0
    %171 = vmatpush.msra.mxu0 0.0
    %172 = vmatpush.msra.mxu0 0.0
    %173 = vmatpush.msra.mxu0 0.0
    %174 = vmatpush.msra.mxu0 0.0
    %175 = vmatpush.msra.mxu0 0.0
    %176 = vmatpush.msra.mxu0 0.0
    %177 = vmatpush.msra.mxu0 %v160
    %178 = vmatmul.f32.gmra.mxu0 %v136
    %v179 = vpop.f32.mrf.mxu0
    %v180 = vadd.f32 0.0, %v179
    %181 = vmatmul.f32.gmra.mxu0 %v139
    %v182 = vpop.f32.mrf.mxu0
    %v183 = vadd.f32 0.0, %v182
    %184 = vmatmul.f32.gmra.mxu0 %v142
    %v185 = vpop.f32.mrf.mxu0
    %v186 = vadd.f32 0.0, %v185
    %187 = vmatmul.f32.gmra.mxu0 %v145
    %v188 = vpop.f32.mrf.mxu0
    %v189 = vadd.f32 0.0, %v188
    %190 = vmatmul.f32.gmra.mxu0 %v148
    %v191 = vpop.f32.mrf.mxu0
    %v192 = vadd.f32 0.0, %v191
    %193 = vmatmul.f32.gmra.mxu0 %v151
    %v194 = vpop.f32.mrf.mxu0
    %v195 = vadd.f32 0.0, %v194
    %196 = vmatmul.f32.gmra.mxu0 %v154
    %v197 = vpop.f32.mrf.mxu0
    %v198 = vadd.f32 0.0, %v197
    %199 = vmatmul.f32.gmra.mxu0 %v157
    %v200 = vpop.f32.mrf.mxu0
    %v201 = vadd.f32 0.0, %v200
    %202 = vdwg.mxu0
    %v203 = vadd.f32 %v180, %v132
    %v204 = vadd.f32 %v183, %v132
    %v205 = vadd.f32 %v186, %v132
    %v206 = vadd.f32 %v189, %v132
    %v207 = vadd.f32 %v192, %v132
    %v208 = vadd.f32 %v195, %v132
    %v209 = vadd.f32 %v198, %v132
    %v210 = vadd.f32 %v201, %v132
    %v211 = vtanh.pop %v203
    %v212 = vtanh.pop %v204
    %v213 = vtanh.pop %v205
    %v214 = vtanh.pop %v206
    %v215 = vtanh.pop %v207
    %v216 = vtanh.pop %v208
    %v217 = vtanh.pop %v209
    %v218 = vtanh.pop %v210
    %v219 = vld [vmem:[#allocation2] sm:$0xff]
    %v220 = vld [vmem:[#allocation2 + $0x8] sm:$0xff]
    %v221 = vld [vmem:[#allocation2 + $0x10] sm:$0xff]
    %v222 = vld [vmem:[#allocation2 + $0x18] sm:$0xff]
    %v223 = vld [vmem:[#allocation2 + $0x20] sm:$0xff]
    %v224 = vld [vmem:[#allocation2 + $0x28] sm:$0xff]
    %v225 = vld [vmem:[#allocation2 + $0x30] sm:$0xff]
    %v226 = vld [vmem:[#allocation2 + $0x38] sm:$0xff]
    %v227 = vld [vmem:[#allocation2 + $0x40] sm:$0xff]
    %v228 = vld [vmem:[#allocation2 + $0x48] sm:$0xff]
    %v229 = vld [vmem:[#allocation2 + $0x50] sm:$0xff]
    %v230 = vld [vmem:[#allocation2 + $0x58] sm:$0xff]
    %v231 = vld [vmem:[#allocation2 + $0x60] sm:$0xff]
    %v232 = vld [vmem:[#allocation2 + $0x68] sm:$0xff]
    %v233 = vld [vmem:[#allocation2 + $0x70] sm:$0xff]
    %v234 = vld [vmem:[#allocation2 + $0x78] sm:$0xff]
    %v235 = vld [vmem:[#allocation2 + $0x80] sm:$0xff]
    %v236 = vld [vmem:[#allocation2 + $0x88] sm:$0xff]
    %v237 = vld [vmem:[#allocation2 + $0x90] sm:$0xff]
    %v238 = vld [vmem:[#allocation2 + $0x98] sm:$0xff]
    %v239 = vld [vmem:[#allocation2 + $0xa0] sm:$0xff]
    %v240 = vld [vmem:[#allocation2 + $0xa8] sm:$0xff]
    %v241 = vld [vmem:[#allocation2 + $0xb0] sm:$0xff]
    %v242 = vld [vmem:[#allocation2 + $0xb8] sm:$0xff]
    %v243 = vld [vmem:[#allocation2 + $0xc0] sm:$0xff]
    %v244 = vld [vmem:[#allocation2 + $0xc8] sm:$0xff]
    %v245 = vld [vmem:[#allocation2 + $0xd0] sm:$0xff]
    %v246 = vld [vmem:[#allocation2 + $0xd8] sm:$0xff]
    %v247 = vld [vmem:[#allocation2 + $0xe0] sm:$0xff]
    %v248 = vld [vmem:[#allocation2 + $0xe8] sm:$0xff]
    %v249 = vld [vmem:[#allocation2 + $0xf0] sm:$0xff]
    %v250 = vld [vmem:[#allocation2 + $0xf8] sm:$0xff]
    %v251 = vld [vmem:[#allocation2 + $0x100] sm:$0xff]
    %v252 = vld [vmem:[#allocation2 + $0x108] sm:$0xff]
    %v253 = vld [vmem:[#allocation2 + $0x110] sm:$0xff]
    %v254 = vld [vmem:[#allocation2 + $0x118] sm:$0xff]
    %v255 = vld [vmem:[#allocation2 + $0x120] sm:$0xff]
    %v256 = vld [vmem:[#allocation2 + $0x128] sm:$0xff]
    %v257 = vld [vmem:[#allocation2 + $0x130] sm:$0xff]
    %v258 = vld [vmem:[#allocation2 + $0x138] sm:$0xff]
    %v259 = vld [vmem:[#allocation2 + $0x140] sm:$0xff]
    %v260 = vld [vmem:[#allocation2 + $0x148] sm:$0xff]
    %v261 = vld [vmem:[#allocation2 + $0x150] sm:$0xff]
    %v262 = vld [vmem:[#allocation2 + $0x158] sm:$0xff]
    %v263 = vld [vmem:[#allocation2 + $0x160] sm:$0xff]
    %v264 = vld [vmem:[#allocation2 + $0x168] sm:$0xff]
    %v265 = vld [vmem:[#allocation2 + $0x170] sm:$0xff]
    %v266 = vld [vmem:[#allocation2 + $0x178] sm:$0xff]
    %v267 = vld [vmem:[#allocation2 + $0x180] sm:$0xff]
    %v268 = vld [vmem:[#allocation2 + $0x188] sm:$0xff]
    %v269 = vld [vmem:[#allocation2 + $0x190] sm:$0xff]
    %v270 = vld [vmem:[#allocation2 + $0x198] sm:$0xff]
    %v271 = vld [vmem:[#allocation2 + $0x1a0] sm:$0xff]
    %v272 = vld [vmem:[#allocation2 + $0x1a8] sm:$0xff]
    %v273 = vld [vmem:[#allocation2 + $0x1b0] sm:$0xff]
    %v274 = vld [vmem:[#allocation2 + $0x1b8] sm:$0xff]
    %v275 = vld [vmem:[#allocation2 + $0x1c0] sm:$0xff]
    %v276 = vld [vmem:[#allocation2 + $0x1c8] sm:$0xff]
    %v277 = vld [vmem:[#allocation2 + $0x1d0] sm:$0xff]
    %v278 = vld [vmem:[#allocation2 + $0x1d8] sm:$0xff]
    %v279 = vld [vmem:[#allocation2 + $0x1e0] sm:$0xff]
    %v280 = vld [vmem:[#allocation2 + $0x1e8] sm:$0xff]
    %v281 = vld [vmem:[#allocation2 + $0x1f0] sm:$0xff]
    %v282 = vld [vmem:[#allocation2 + $0x1f8] sm:$0xff]
    %v283 = vld [vmem:[%s8] sm:$0xf]
    %v285 = vperm.slane %v283, 0
    %v286 = vperm.slane %v283, 1
    %v287 = vperm.slane %v283, 2
    %v288 = vperm.slane %v283, 3
    %293 = vmatpush.msra.mxu0 %v279
    %294 = vmatpush.msra.mxu0 %v275
    %295 = vmatpush.msra.mxu0 %v271
    %296 = vmatpush.msra.mxu0 %v267
    %297 = vmatpush.msra.mxu0 %v263
    %298 = vmatpush.msra.mxu0 %v259
    %299 = vmatpush.msra.mxu0 %v255
    %300 = vmatpush.msra.mxu0 %v251
    %301 = vmatpush.msra.mxu0 %v247
    %302 = vmatpush.msra.mxu0 %v243
    %303 = vmatpush.msra.mxu0 %v239
    %304 = vmatpush.msra.mxu0 %v235
    %305 = vmatpush.msra.mxu0 %v231
    %306 = vmatpush.msra.mxu0 %v227
    %307 = vmatpush.msra.mxu0 %v223
    %308 = vmatpush.msra.mxu0 %v219
    %309 = vmatmul.f32.gmra.mxu0 %v211
    %v310 = vpop.f32.mrf.mxu0
    %v311 = vadd.f32 %v285, %v310
    %312 = vmatmul.f32.gmra.mxu0 %v212
    %v313 = vpop.f32.mrf.mxu0
    %v314 = vadd.f32 %v285, %v313
    %315 = vmatmul.f32.gmra.mxu0 %v213
    %v316 = vpop.f32.mrf.mxu0
    %v317 = vadd.f32 %v285, %v316
    %318 = vmatmul.f32.gmra.mxu0 %v214
    %v319 = vpop.f32.mrf.mxu0
    %v320 = vadd.f32 %v285, %v319
    %321 = vmatmul.f32.gmra.mxu0 %v215
    %v322 = vpop.f32.mrf.mxu0
    %v323 = vadd.f32 %v285, %v322
    %324 = vmatmul.f32.gmra.mxu0 %v216
    %v325 = vpop.f32.mrf.mxu0
    %v326 = vadd.f32 %v285, %v325
    %327 = vmatmul.f32.gmra.mxu0 %v217
    %v328 = vpop.f32.mrf.mxu0
    %v329 = vadd.f32 %v285, %v328
    %330 = vmatmul.f32.gmra.mxu0 %v218
    %v331 = vpop.f32.mrf.mxu0
    %v332 = vadd.f32 %v285, %v331
    %333 = vdwg.mxu0
    %334 = vmatpush.msra.mxu0 %v280
    %335 = vmatpush.msra.mxu0 %v276
    %336 = vmatpush.msra.mxu0 %v272
    %337 = vmatpush.msra.mxu0 %v268
    %338 = vmatpush.msra.mxu0 %v264
    %339 = vmatpush.msra.mxu0 %v260
    %340 = vmatpush.msra.mxu0 %v256
    %341 = vmatpush.msra.mxu0 %v252
    %342 = vmatpush.msra.mxu0 %v248
    %343 = vmatpush.msra.mxu0 %v244
    %344 = vmatpush.msra.mxu0 %v240
    %345 = vmatpush.msra.mxu0 %v236
    %346 = vmatpush.msra.mxu0 %v232
    %347 = vmatpush.msra.mxu0 %v228
    %348 = vmatpush.msra.mxu0 %v224
    %349 = vmatpush.msra.mxu0 %v220
    %350 = vmatmul.f32.gmra.mxu0 %v211
    %v351 = vpop.f32.mrf.mxu0
    %v352 = vadd.f32 %v286, %v351
    %353 = vmatmul.f32.gmra.mxu0 %v212
    %v354 = vpop.f32.mrf.mxu0
    %v355 = vadd.f32 %v286, %v354
    %356 = vmatmul.f32.gmra.mxu0 %v213
    %v357 = vpop.f32.mrf.mxu0
    %v358 = vadd.f32 %v286, %v357
    %359 = vmatmul.f32.gmra.mxu0 %v214
    %v360 = vpop.f32.mrf.mxu0
    %v361 = vadd.f32 %v286, %v360
    %362 = vmatmul.f32.gmra.mxu0 %v215
    %v363 = vpop.f32.mrf.mxu0
    %v364 = vadd.f32 %v286, %v363
    %365 = vmatmul.f32.gmra.mxu0 %v216
    %v366 = vpop.f32.mrf.mxu0
    %v367 = vadd.f32 %v286, %v366
    %368 = vmatmul.f32.gmra.mxu0 %v217
    %v369 = vpop.f32.mrf.mxu0
    %v370 = vadd.f32 %v286, %v369
    %371 = vmatmul.f32.gmra.mxu0 %v218
    %v372 = vpop.f32.mrf.mxu0
    %v373 = vadd.f32 %v286, %v372
    %374 = vdwg.mxu0
    %375 = vmatpush.msra.mxu0 %v281
    %376 = vmatpush.msra.mxu0 %v277
    %377 = vmatpush.msra.mxu0 %v273
    %378 = vmatpush.msra.mxu0 %v269
    %379 = vmatpush.msra.mxu0 %v265
    %380 = vmatpush.msra.mxu0 %v261
    %381 = vmatpush.msra.mxu0 %v257
    %382 = vmatpush.msra.mxu0 %v253
    %383 = vmatpush.msra.mxu0 %v249
    %384 = vmatpush.msra.mxu0 %v245
    %385 = vmatpush.msra.mxu0 %v241
    %386 = vmatpush.msra.mxu0 %v237
    %387 = vmatpush.msra.mxu0 %v233
    %388 = vmatpush.msra.mxu0 %v229
    %389 = vmatpush.msra.mxu0 %v225
    %390 = vmatpush.msra.mxu0 %v221
    %391 = vmatmul.f32.gmra.mxu0 %v211
    %v392 = vpop.f32.mrf.mxu0
    %v393 = vadd.f32 %v287, %v392
    %394 = vmatmul.f32.gmra.mxu0 %v212
    %v395 = vpop.f32.mrf.mxu0
    %v396 = vadd.f32 %v287, %v395
    %397 = vmatmul.f32.gmra.mxu0 %v213
    %v398 = vpop.f32.mrf.mxu0
    %v399 = vadd.f32 %v287, %v398
    %400 = vmatmul.f32.gmra.mxu0 %v214
    %v401 = vpop.f32.mrf.mxu0
    %v402 = vadd.f32 %v287, %v401
    %403 = vmatmul.f32.gmra.mxu0 %v215
    %v404 = vpop.f32.mrf.mxu0
    %v405 = vadd.f32 %v287, %v404
    %406 = vmatmul.f32.gmra.mxu0 %v216
    %v407 = vpop.f32.mrf.mxu0
    %v408 = vadd.f32 %v287, %v407
    %409 = vmatmul.f32.gmra.mxu0 %v217
    %v410 = vpop.f32.mrf.mxu0
    %v411 = vadd.f32 %v287, %v410
    %412 = vmatmul.f32.gmra.mxu0 %v218
    %v413 = vpop.f32.mrf.mxu0
    %v414 = vadd.f32 %v287, %v413
    %415 = vdwg.mxu0
    %416 = vmatpush.msra.mxu0 %v282
    %417 = vmatpush.msra.mxu0 %v278
    %418 = vmatpush.msra.mxu0 %v274
    %419 = vmatpush.msra.mxu0 %v270
    %420 = vmatpush.msra.mxu0 %v266
    %421 = vmatpush.msra.mxu0 %v262
    %422 = vmatpush.msra.mxu0 %v258
    %423 = vmatpush.msra.mxu0 %v254
    %424 = vmatpush.msra.mxu0 %v250
    %425 = vmatpush.msra.mxu0 %v246
    %426 = vmatpush.msra.mxu0 %v242
    %427 = vmatpush.msra.mxu0 %v238
    %428 = vmatpush.msra.mxu0 %v234
    %429 = vmatpush.msra.mxu0 %v230
    %430 = vmatpush.msra.mxu0 %v226
    %431 = vmatpush.msra.mxu0 %v222
    %432 = vmatmul.f32.gmra.mxu0 %v211
    %v433 = vpop.f32.mrf.mxu0
    %v434 = vadd.f32 %v288, %v433
    %435 = vmatmul.f32.gmra.mxu0 %v212
    %v436 = vpop.f32.mrf.mxu0
    %v437 = vadd.f32 %v288, %v436
    %438 = vmatmul.f32.gmra.mxu0 %v213
    %v439 = vpop.f32.mrf.mxu0
    %v440 = vadd.f32 %v288, %v439
    %441 = vmatmul.f32.gmra.mxu0 %v214
    %v442 = vpop.f32.mrf.mxu0
    %v443 = vadd.f32 %v288, %v442
    %444 = vmatmul.f32.gmra.mxu0 %v215
    %v445 = vpop.f32.mrf.mxu0
    %v446 = vadd.f32 %v288, %v445
    %447 = vmatmul.f32.gmra.mxu0 %v216
    %v448 = vpop.f32.mrf.mxu0
    %v449 = vadd.f32 %v288, %v448
    %450 = vmatmul.f32.gmra.mxu0 %v217
    %v451 = vpop.f32.mrf.mxu0
    %v452 = vadd.f32 %v288, %v451
    %453 = vmatmul.f32.gmra.mxu0 %v218
    %v454 = vpop.f32.mrf.mxu0
    %v455 = vadd.f32 %v288, %v454
    %456 = vdwg.mxu0
    %v457 = vld [vmem:[#allocation5] sm:$0xff]
    %v458 = vld [vmem:[#allocation5 + $0x8] sm:$0xff]
    %v459 = vld [vmem:[#allocation5 + $0x10] sm:$0xff]
    %v460 = vld [vmem:[#allocation5 + $0x18] sm:$0xff]
    %v461 = vld [vmem:[#allocation5 + $0x20] sm:$0xff]
    %v462 = vld [vmem:[#allocation5 + $0x28] sm:$0xff]
    %v463 = vld [vmem:[#allocation5 + $0x30] sm:$0xff]
    %v464 = vld [vmem:[#allocation5 + $0x38] sm:$0xff]
    %v465 = vld [vmem:[#allocation5 + $0x40] sm:$0xff]
    %v466 = vld [vmem:[#allocation5 + $0x48] sm:$0xff]
    %v467 = vld [vmem:[#allocation5 + $0x50] sm:$0xff]
    %v468 = vld [vmem:[#allocation5 + $0x58] sm:$0xff]
    %v469 = vld [vmem:[#allocation5 + $0x60] sm:$0xff]
    %v470 = vld [vmem:[#allocation5 + $0x68] sm:$0xff]
    %v471 = vld [vmem:[#allocation5 + $0x70] sm:$0xff]
    %v472 = vld [vmem:[#allocation5 + $0x78] sm:$0xff]
    %v473 = vld [vmem:[#allocation5 + $0x80] sm:$0xff]
    %v474 = vld [vmem:[#allocation5 + $0x88] sm:$0xff]
    %v475 = vld [vmem:[#allocation5 + $0x90] sm:$0xff]
    %v476 = vld [vmem:[#allocation5 + $0x98] sm:$0xff]
    %v477 = vld [vmem:[#allocation5 + $0xa0] sm:$0xff]
    %v478 = vld [vmem:[#allocation5 + $0xa8] sm:$0xff]
    %v479 = vld [vmem:[#allocation5 + $0xb0] sm:$0xff]
    %v480 = vld [vmem:[#allocation5 + $0xb8] sm:$0xff]
    %v481 = vld [vmem:[#allocation5 + $0xc0] sm:$0xff]
    %v482 = vld [vmem:[#allocation5 + $0xc8] sm:$0xff]
    %v483 = vld [vmem:[#allocation5 + $0xd0] sm:$0xff]
    %v484 = vld [vmem:[#allocation5 + $0xd8] sm:$0xff]
    %v485 = vld [vmem:[#allocation5 + $0xe0] sm:$0xff]
    %v486 = vld [vmem:[#allocation5 + $0xe8] sm:$0xff]
    %v487 = vld [vmem:[#allocation5 + $0xf0] sm:$0xff]
    %v488 = vld [vmem:[#allocation5 + $0xf8] sm:$0xff]
    %v489 = vld [vmem:[#allocation5 + $0x100] sm:$0xff]
    %v490 = vld [vmem:[#allocation5 + $0x108] sm:$0xff]
    %v491 = vld [vmem:[#allocation5 + $0x110] sm:$0xff]
    %v492 = vld [vmem:[#allocation5 + $0x118] sm:$0xff]
    %v493 = vld [vmem:[#allocation5 + $0x120] sm:$0xff]
    %v494 = vld [vmem:[#allocation5 + $0x128] sm:$0xff]
    %v495 = vld [vmem:[#allocation5 + $0x130] sm:$0xff]
    %v496 = vld [vmem:[#allocation5 + $0x138] sm:$0xff]
    %v497 = vld [vmem:[#allocation5 + $0x140] sm:$0xff]
    %v498 = vld [vmem:[#allocation5 + $0x148] sm:$0xff]
    %v499 = vld [vmem:[#allocation5 + $0x150] sm:$0xff]
    %v500 = vld [vmem:[#allocation5 + $0x158] sm:$0xff]
    %v501 = vld [vmem:[#allocation5 + $0x160] sm:$0xff]
    %v502 = vld [vmem:[#allocation5 + $0x168] sm:$0xff]
    %v503 = vld [vmem:[#allocation5 + $0x170] sm:$0xff]
    %v504 = vld [vmem:[#allocation5 + $0x178] sm:$0xff]
    %v505 = vld [vmem:[#allocation5 + $0x180] sm:$0xff]
    %v506 = vld [vmem:[#allocation5 + $0x188] sm:$0xff]
    %v507 = vld [vmem:[#allocation5 + $0x190] sm:$0xff]
    %v508 = vld [vmem:[#allocation5 + $0x198] sm:$0xff]
    %v509 = vld [vmem:[#allocation5 + $0x1a0] sm:$0xff]
    %v510 = vld [vmem:[#allocation5 + $0x1a8] sm:$0xff]
    %v511 = vld [vmem:[#allocation5 + $0x1b0] sm:$0xff]
    %v512 = vld [vmem:[#allocation5 + $0x1b8] sm:$0xff]
    %v513 = vld [vmem:[#allocation5 + $0x1c0] sm:$0xff]
    %v514 = vld [vmem:[#allocation5 + $0x1c8] sm:$0xff]
    %v515 = vld [vmem:[#allocation5 + $0x1d0] sm:$0xff]
    %v516 = vld [vmem:[#allocation5 + $0x1d8] sm:$0xff]
    %v517 = vld [vmem:[#allocation5 + $0x1e0] sm:$0xff]
    %v518 = vld [vmem:[#allocation5 + $0x1e8] sm:$0xff]
    %v519 = vld [vmem:[#allocation5 + $0x1f0] sm:$0xff]
    %v520 = vld [vmem:[#allocation5 + $0x1f8] sm:$0xff]
    %521 = vmatpush.msra.mxu0 %v517
    %522 = vmatpush.msra.mxu0 %v513
    %523 = vmatpush.msra.mxu0 %v509
    %524 = vmatpush.msra.mxu0 %v505
    %525 = vmatpush.msra.mxu0 %v501
    %526 = vmatpush.msra.mxu0 %v497
    %527 = vmatpush.msra.mxu0 %v493
    %528 = vmatpush.msra.mxu0 %v489
    %529 = vmatpush.msra.mxu0 %v485
    %530 = vmatpush.msra.mxu0 %v481
    %531 = vmatpush.msra.mxu0 %v477
    %532 = vmatpush.msra.mxu0 %v473
    %533 = vmatpush.msra.mxu0 %v469
    %534 = vmatpush.msra.mxu0 %v465
    %535 = vmatpush.msra.mxu0 %v461
    %536 = vmatpush.msra.mxu0 %v457
    %537 = vmatmul.f32.gmra.mxu0 0.0
    %v538 = vpop.f32.mrf.mxu0
    %v539 = vadd.f32 0.0, %v538
    %540 = vdwg.mxu0
    %541 = vmatpush.msra.mxu0 %v518
    %542 = vmatpush.msra.mxu0 %v514
    %543 = vmatpush.msra.mxu0 %v510
    %544 = vmatpush.msra.mxu0 %v506
    %545 = vmatpush.msra.mxu0 %v502
    %546 = vmatpush.msra.mxu0 %v498
    %547 = vmatpush.msra.mxu0 %v494
    %548 = vmatpush.msra.mxu0 %v490
    %549 = vmatpush.msra.mxu0 %v486
    %550 = vmatpush.msra.mxu0 %v482
    %551 = vmatpush.msra.mxu0 %v478
    %552 = vmatpush.msra.mxu0 %v474
    %553 = vmatpush.msra.mxu0 %v470
    %554 = vmatpush.msra.mxu0 %v466
    %555 = vmatpush.msra.mxu0 %v462
    %556 = vmatpush.msra.mxu0 %v458
    %557 = vmatmul.f32.gmra.mxu0 0.0
    %v558 = vpop.f32.mrf.mxu0
    %v559 = vadd.f32 0.0, %v558
    %560 = vdwg.mxu0
    %561 = vmatpush.msra.mxu0 %v519
    %562 = vmatpush.msra.mxu0 %v515
    %563 = vmatpush.msra.mxu0 %v511
    %564 = vmatpush.msra.mxu0 %v507
    %565 = vmatpush.msra.mxu0 %v503
    %566 = vmatpush.msra.mxu0 %v499
    %567 = vmatpush.msra.mxu0 %v495
    %568 = vmatpush.msra.mxu0 %v491
    %569 = vmatpush.msra.mxu0 %v487
    %570 = vmatpush.msra.mxu0 %v483
    %571 = vmatpush.msra.mxu0 %v479
    %572 = vmatpush.msra.mxu0 %v475
    %573 = vmatpush.msra.mxu0 %v471
    %574 = vmatpush.msra.mxu0 %v467
    %575 = vmatpush.msra.mxu0 %v463
    %576 = vmatpush.msra.mxu0 %v459
    %577 = vmatmul.f32.gmra.mxu0 0.0
    %v578 = vpop.f32.mrf.mxu0
    %v579 = vadd.f32 0.0, %v578
    %580 = vdwg.mxu0
    %581 = vmatpush.msra.mxu0 %v520
    %582 = vmatpush.msra.mxu0 %v516
    %583 = vmatpush.msra.mxu0 %v512
    %584 = vmatpush.msra.mxu0 %v508
    %585 = vmatpush.msra.mxu0 %v504
    %586 = vmatpush.msra.mxu0 %v500
    %587 = vmatpush.msra.mxu0 %v496
    %588 = vmatpush.msra.mxu0 %v492
    %589 = vmatpush.msra.mxu0 %v488
    %590 = vmatpush.msra.mxu0 %v484
    %591 = vmatpush.msra.mxu0 %v480
    %592 = vmatpush.msra.mxu0 %v476
    %593 = vmatpush.msra.mxu0 %v472
    %594 = vmatpush.msra.mxu0 %v468
    %595 = vmatpush.msra.mxu0 %v464
    %596 = vmatpush.msra.mxu0 %v460
    %597 = vmatmul.f32.gmra.mxu0 0.0
    %v598 = vpop.f32.mrf.mxu0
    %v599 = vadd.f32 0.0, %v598
    %600 = vdwg.mxu0
    %v601 = vadd.f32 %v311, %v539
    %v602 = vadd.f32 %v352, %v559
    %v603 = vadd.f32 %v393, %v579
    %v604 = vadd.f32 %v434, %v599
    %v605 = vxor.u32 %v601, 2147483648
    %v606 = vmul.f32 %v605, 1.442695
    %v607 = vpow.pop %v606
    %v608 = vadd.f32 %v607, 1.0
    %v609 = vrcp.pop %v608
    %v610 = vmul.f32 %v608, %v609
    %v611 = vsub.f32 1.0, %v610
    %v612 = vmul.f32 %v609, %v611
    %v613 = vadd.f32 %v609, %v612
    %vm614 = vweird.f32 %v608
    %vm615 = vweird.f32 %v609
    %vm616 = vmor %vm614, %vm615
    %v617 = vsel %vm616, %v609, %v613
    %v618 = vand.u32 2147483647, %v608
    %vm619 = vcmp.eq.f32.partialorder %v618, 8.507059e+37
    %v620 = vand.u32 %v608, 2147483648
    %v621 = vor.u32 1.1754944e-38, %v620
    %v622 = vsel %vm619, %v621, %v617
    %v623 = vmul.f32 1.0, %v622
    %v624 = vxor.u32 %v602, 2147483648
    %v625 = vmul.f32 %v624, 1.442695
    %v626 = vpow.pop %v625
    %v627 = vadd.f32 %v626, 1.0
    %v628 = vrcp.pop %v627
    %v629 = vmul.f32 %v627, %v628
    %v630 = vsub.f32 1.0, %v629
    %v631 = vmul.f32 %v628, %v630
    %v632 = vadd.f32 %v628, %v631
    %vm633 = vweird.f32 %v627
    %vm634 = vweird.f32 %v628
    %vm635 = vmor %vm633, %vm634
    %v636 = vsel %vm635, %v628, %v632
    %v637 = vand.u32 2147483647, %v627
    %vm638 = vcmp.eq.f32.partialorder %v637, 8.507059e+37
    %v639 = vand.u32 %v627, 2147483648
    %v640 = vor.u32 1.1754944e-38, %v639
    %v641 = vsel %vm638, %v640, %v636
    %v642 = vmul.f32 1.0, %v641
    %v643 = vtanh.pop %v603
    %v644 = vxor.u32 %v604, 2147483648
    %v645 = vmul.f32 %v644, 1.442695
    %v646 = vpow.pop %v645
    %v647 = vadd.f32 %v646, 1.0
    %v648 = vrcp.pop %v647
    %v649 = vmul.f32 %v647, %v648
    %v650 = vsub.f32 1.0, %v649
    %v651 = vmul.f32 %v648, %v650
    %v652 = vadd.f32 %v648, %v651
    %vm653 = vweird.f32 %v647
    %vm654 = vweird.f32 %v648
    %vm655 = vmor %vm653, %vm654
    %v656 = vsel %vm655, %v648, %v652
    %v657 = vand.u32 2147483647, %v647
    %vm658 = vcmp.eq.f32.partialorder %v657, 8.507059e+37
    %v659 = vand.u32 %v647, 2147483648
    %v660 = vor.u32 1.1754944e-38, %v659
    %v661 = vsel %vm658, %v660, %v656
    %v662 = vmul.f32 1.0, %v661
    %v663 = vmul.f32 %v642, 0.0
    %v664 = vmul.f32 %v623, %v643
    %v665 = vadd.f32 %v663, %v664
    %v666 = vtanh.pop %v665
    %v667 = vmul.f32 %v662, %v666
    %668 = vmatpush.msra.mxu0 %v517
    %669 = vmatpush.msra.mxu0 %v513
    %670 = vmatpush.msra.mxu0 %v509
    %671 = vmatpush.msra.mxu0 %v505
    %672 = vmatpush.msra.mxu0 %v501
    %673 = vmatpush.msra.mxu0 %v497
    %674 = vmatpush.msra.mxu0 %v493
    %675 = vmatpush.msra.mxu0 %v489
    %676 = vmatpush.msra.mxu0 %v485
    %677 = vmatpush.msra.mxu0 %v481
    %678 = vmatpush.msra.mxu0 %v477
    %679 = vmatpush.msra.mxu0 %v473
    %680 = vmatpush.msra.mxu0 %v469
    %681 = vmatpush.msra.mxu0 %v465
    %682 = vmatpush.msra.mxu0 %v461
    %683 = vmatpush.msra.mxu0 %v457
    %684 = vmatmul.f32.gmra.mxu0 %v667
    %v685 = vpop.f32.mrf.mxu0
    %v686 = vadd.f32 0.0, %v685
    %687 = vdwg.mxu0
    %688 = vmatpush.msra.mxu0 %v518
    %689 = vmatpush.msra.mxu0 %v514
    %690 = vmatpush.msra.mxu0 %v510
    %691 = vmatpush.msra.mxu0 %v506
    %692 = vmatpush.msra.mxu0 %v502
    %693 = vmatpush.msra.mxu0 %v498
    %694 = vmatpush.msra.mxu0 %v494
    %695 = vmatpush.msra.mxu0 %v490
    %696 = vmatpush.msra.mxu0 %v486
    %697 = vmatpush.msra.mxu0 %v482
    %698 = vmatpush.msra.mxu0 %v478
    %699 = vmatpush.msra.mxu0 %v474
    %700 = vmatpush.msra.mxu0 %v470
    %701 = vmatpush.msra.mxu0 %v466
    %702 = vmatpush.msra.mxu0 %v462
    %703 = vmatpush.msra.mxu0 %v458
    %704 = vmatmul.f32.gmra.mxu0 %v667
    %v705 = vpop.f32.mrf.mxu0
    %v706 = vadd.f32 0.0, %v705
    %707 = vdwg.mxu0
    %708 = vmatpush.msra.mxu0 %v519
    %709 = vmatpush.msra.mxu0 %v515
    %710 = vmatpush.msra.mxu0 %v511
    %711 = vmatpush.msra.mxu0 %v507
    %712 = vmatpush.msra.mxu0 %v503
    %713 = vmatpush.msra.mxu0 %v499
    %714 = vmatpush.msra.mxu0 %v495
    %715 = vmatpush.msra.mxu0 %v491
    %716 = vmatpush.msra.mxu0 %v487
    %717 = vmatpush.msra.mxu0 %v483
    %718 = vmatpush.msra.mxu0 %v479
    %719 = vmatpush.msra.mxu0 %v475
    %720 = vmatpush.msra.mxu0 %v471
    %721 = vmatpush.msra.mxu0 %v467
    %722 = vmatpush.msra.mxu0 %v463
    %723 = vmatpush.msra.mxu0 %v459
    %724 = vmatmul.f32.gmra.mxu0 %v667
    %v725 = vpop.f32.mrf.mxu0
    %v726 = vadd.f32 0.0, %v725
    %727 = vdwg.mxu0
    %728 = vmatpush.msra.mxu0 %v520
    %729 = vmatpush.msra.mxu0 %v516
    %730 = vmatpush.msra.mxu0 %v512
    %731 = vmatpush.msra.mxu0 %v508
    %732 = vmatpush.msra.mxu0 %v504
    %733 = vmatpush.msra.mxu0 %v500
    %734 = vmatpush.msra.mxu0 %v496
    %735 = vmatpush.msra.mxu0 %v492
    %736 = vmatpush.msra.mxu0 %v488
    %737 = vmatpush.msra.mxu0 %v484
    %738 = vmatpush.msra.mxu0 %v480
    %739 = vmatpush.msra.mxu0 %v476
    %740 = vmatpush.msra.mxu0 %v472
    %741 = vmatpush.msra.mxu0 %v468
    %742 = vmatpush.msra.mxu0 %v464
    %743 = vmatpush.msra.mxu0 %v460
    %744 = vmatmul.f32.gmra.mxu0 %v667
    %v745 = vpop.f32.mrf.mxu0
    %v746 = vadd.f32 0.0, %v745
    %747 = vdwg.mxu0
    %v748 = vadd.f32 %v314, %v686
    %v749 = vadd.f32 %v355, %v706
    %v750 = vadd.f32 %v396, %v726
    %v751 = vadd.f32 %v437, %v746
    %v752 = vxor.u32 %v748, 2147483648
    %v753 = vmul.f32 %v752, 1.442695
    %v754 = vpow.pop %v753
    %v755 = vadd.f32 %v754, 1.0
    %v756 = vrcp.pop %v755
    %v757 = vmul.f32 %v755, %v756
    %v758 = vsub.f32 1.0, %v757
    %v759 = vmul.f32 %v756, %v758
    %v760 = vadd.f32 %v756, %v759
    %vm761 = vweird.f32 %v755
    %vm762 = vweird.f32 %v756
    %vm763 = vmor %vm761, %vm762
    %v764 = vsel %vm763, %v756, %v760
    %v765 = vand.u32 2147483647, %v755
    %vm766 = vcmp.eq.f32.partialorder %v765, 8.507059e+37
    %v767 = vand.u32 %v755, 2147483648
    %v768 = vor.u32 1.1754944e-38, %v767
    %v769 = vsel %vm766, %v768, %v764
    %v770 = vmul.f32 1.0, %v769
    %v771 = vxor.u32 %v749, 2147483648
    %v772 = vmul.f32 %v771, 1.442695
    %v773 = vpow.pop %v772
    %v774 = vadd.f32 %v773, 1.0
    %v775 = vrcp.pop %v774
    %v776 = vmul.f32 %v774, %v775
    %v777 = vsub.f32 1.0, %v776
    %v778 = vmul.f32 %v775, %v777
    %v779 = vadd.f32 %v775, %v778
    %vm780 = vweird.f32 %v774
    %vm781 = vweird.f32 %v775
    %vm782 = vmor %vm780, %vm781
    %v783 = vsel %vm782, %v775, %v779
    %v784 = vand.u32 2147483647, %v774
    %vm785 = vcmp.eq.f32.partialorder %v784, 8.507059e+37
    %v786 = vand.u32 %v774, 2147483648
    %v787 = vor.u32 1.1754944e-38, %v786
    %v788 = vsel %vm785, %v787, %v783
    %v789 = vmul.f32 1.0, %v788
    %v790 = vtanh.pop %v750
    %v791 = vxor.u32 %v751, 2147483648
    %v792 = vmul.f32 %v791, 1.442695
    %v793 = vpow.pop %v792
    %v794 = vadd.f32 %v793, 1.0
    %v795 = vrcp.pop %v794
    %v796 = vmul.f32 %v794, %v795
    %v797 = vsub.f32 1.0, %v796
    %v798 = vmul.f32 %v795, %v797
    %v799 = vadd.f32 %v795, %v798
    %vm800 = vweird.f32 %v794
    %vm801 = vweird.f32 %v795
    %vm802 = vmor %vm800, %vm801
    %v803 = vsel %vm802, %v795, %v799
    %v804 = vand.u32 2147483647, %v794
    %vm805 = vcmp.eq.f32.partialorder %v804, 8.507059e+37
    %v806 = vand.u32 %v794, 2147483648
    %v807 = vor.u32 1.1754944e-38, %v806
    %v808 = vsel %vm805, %v807, %v803
    %v809 = vmul.f32 1.0, %v808
    %v810 = vmul.f32 %v789, %v665
    %v811 = vmul.f32 %v770, %v790
    %v812 = vadd.f32 %v810, %v811
    %v813 = vtanh.pop %v812
    %v814 = vmul.f32 %v809, %v813
    %815 = vmatpush.msra.mxu0 %v517
    %816 = vmatpush.msra.mxu0 %v513
    %817 = vmatpush.msra.mxu0 %v509
    %818 = vmatpush.msra.mxu0 %v505
    %819 = vmatpush.msra.mxu0 %v501
    %820 = vmatpush.msra.mxu0 %v497
    %821 = vmatpush.msra.mxu0 %v493
    %822 = vmatpush.msra.mxu0 %v489
    %823 = vmatpush.msra.mxu0 %v485
    %824 = vmatpush.msra.mxu0 %v481
    %825 = vmatpush.msra.mxu0 %v477
    %826 = vmatpush.msra.mxu0 %v473
    %827 = vmatpush.msra.mxu0 %v469
    %828 = vmatpush.msra.mxu0 %v465
    %829 = vmatpush.msra.mxu0 %v461
    %830 = vmatpush.msra.mxu0 %v457
    %831 = vmatmul.f32.gmra.mxu0 %v814
    %v832 = vpop.f32.mrf.mxu0
    %v833 = vadd.f32 0.0, %v832
    %834 = vdwg.mxu0
    %835 = vmatpush.msra.mxu0 %v518
    %836 = vmatpush.msra.mxu0 %v514
    %837 = vmatpush.msra.mxu0 %v510
    %838 = vmatpush.msra.mxu0 %v506
    %839 = vmatpush.msra.mxu0 %v502
    %840 = vmatpush.msra.mxu0 %v498
    %841 = vmatpush.msra.mxu0 %v494
    %842 = vmatpush.msra.mxu0 %v490
    %843 = vmatpush.msra.mxu0 %v486
    %844 = vmatpush.msra.mxu0 %v482
    %845 = vmatpush.msra.mxu0 %v478
    %846 = vmatpush.msra.mxu0 %v474
    %847 = vmatpush.msra.mxu0 %v470
    %848 = vmatpush.msra.mxu0 %v466
    %849 = vmatpush.msra.mxu0 %v462
    %850 = vmatpush.msra.mxu0 %v458
    %851 = vmatmul.f32.gmra.mxu0 %v814
    %v852 = vpop.f32.mrf.mxu0
    %v853 = vadd.f32 0.0, %v852
    %854 = vdwg.mxu0
    %855 = vmatpush.msra.mxu0 %v519
    %856 = vmatpush.msra.mxu0 %v515
    %857 = vmatpush.msra.mxu0 %v511
    %858 = vmatpush.msra.mxu0 %v507
    %859 = vmatpush.msra.mxu0 %v503
    %860 = vmatpush.msra.mxu0 %v499
    %861 = vmatpush.msra.mxu0 %v495
    %862 = vmatpush.msra.mxu0 %v491
    %863 = vmatpush.msra.mxu0 %v487
    %864 = vmatpush.msra.mxu0 %v483
    %865 = vmatpush.msra.mxu0 %v479
    %866 = vmatpush.msra.mxu0 %v475
    %867 = vmatpush.msra.mxu0 %v471
    %868 = vmatpush.msra.mxu0 %v467
    %869 = vmatpush.msra.mxu0 %v463
    %870 = vmatpush.msra.mxu0 %v459
    %871 = vmatmul.f32.gmra.mxu0 %v814
    %v872 = vpop.f32.mrf.mxu0
    %v873 = vadd.f32 0.0, %v872
    %874 = vdwg.mxu0
    %875 = vmatpush.msra.mxu0 %v520
    %876 = vmatpush.msra.mxu0 %v516
    %877 = vmatpush.msra.mxu0 %v512
    %878 = vmatpush.msra.mxu0 %v508
    %879 = vmatpush.msra.mxu0 %v504
    %880 = vmatpush.msra.mxu0 %v500
    %881 = vmatpush.msra.mxu0 %v496
    %882 = vmatpush.msra.mxu0 %v492
    %883 = vmatpush.msra.mxu0 %v488
    %884 = vmatpush.msra.mxu0 %v484
    %885 = vmatpush.msra.mxu0 %v480
    %886 = vmatpush.msra.mxu0 %v476
    %887 = vmatpush.msra.mxu0 %v472
    %888 = vmatpush.msra.mxu0 %v468
    %889 = vmatpush.msra.mxu0 %v464
    %890 = vmatpush.msra.mxu0 %v460
    %891 = vmatmul.f32.gmra.mxu0 %v814
    %v892 = vpop.f32.mrf.mxu0
    %v893 = vadd.f32 0.0, %v892
    %894 = vdwg.mxu0
    %v895 = vadd.f32 %v317, %v833
    %v896 = vadd.f32 %v358, %v853
    %v897 = vadd.f32 %v399, %v873
    %v898 = vadd.f32 %v440, %v893
    %v899 = vxor.u32 %v895, 2147483648
    %v900 = vmul.f32 %v899, 1.442695
    %v901 = vpow.pop %v900
    %v902 = vadd.f32 %v901, 1.0
    %v903 = vrcp.pop %v902
    %v904 = vmul.f32 %v902, %v903
    %v905 = vsub.f32 1.0, %v904
    %v906 = vmul.f32 %v903, %v905
    %v907 = vadd.f32 %v903, %v906
    %vm908 = vweird.f32 %v902
    %vm909 = vweird.f32 %v903
    %vm910 = vmor %vm908, %vm909
    %v911 = vsel %vm910, %v903, %v907
    %v912 = vand.u32 2147483647, %v902
    %vm913 = vcmp.eq.f32.partialorder %v912, 8.507059e+37
    %v914 = vand.u32 %v902, 2147483648
    %v915 = vor.u32 1.1754944e-38, %v914
    %v916 = vsel %vm913, %v915, %v911
    %v917 = vmul.f32 1.0, %v916
    %v918 = vxor.u32 %v896, 2147483648
    %v919 = vmul.f32 %v918, 1.442695
    %v920 = vpow.pop %v919
    %v921 = vadd.f32 %v920, 1.0
    %v922 = vrcp.pop %v921
    %v923 = vmul.f32 %v921, %v922
    %v924 = vsub.f32 1.0, %v923
    %v925 = vmul.f32 %v922, %v924
    %v926 = vadd.f32 %v922, %v925
    %vm927 = vweird.f32 %v921
    %vm928 = vweird.f32 %v922
    %vm929 = vmor %vm927, %vm928
    %v930 = vsel %vm929, %v922, %v926
    %v931 = vand.u32 2147483647, %v921
    %vm932 = vcmp.eq.f32.partialorder %v931, 8.507059e+37
    %v933 = vand.u32 %v921, 2147483648
    %v934 = vor.u32 1.1754944e-38, %v933
    %v935 = vsel %vm932, %v934, %v930
    %v936 = vmul.f32 1.0, %v935
    %v937 = vtanh.pop %v897
    %v938 = vxor.u32 %v898, 2147483648
    %v939 = vmul.f32 %v938, 1.442695
    %v940 = vpow.pop %v939
    %v941 = vadd.f32 %v940, 1.0
    %v942 = vrcp.pop %v941
    %v943 = vmul.f32 %v941, %v942
    %v944 = vsub.f32 1.0, %v943
    %v945 = vmul.f32 %v942, %v944
    %v946 = vadd.f32 %v942, %v945
    %vm947 = vweird.f32 %v941
    %vm948 = vweird.f32 %v942
    %vm949 = vmor %vm947, %vm948
    %v950 = vsel %vm949, %v942, %v946
    %v951 = vand.u32 2147483647, %v941
    %vm952 = vcmp.eq.f32.partialorder %v951, 8.507059e+37
    %v953 = vand.u32 %v941, 2147483648
    %v954 = vor.u32 1.1754944e-38, %v953
    %v955 = vsel %vm952, %v954, %v950
    %v956 = vmul.f32 1.0, %v955
    %v957 = vmul.f32 %v936, %v812
    %v958 = vmul.f32 %v917, %v937
    %v959 = vadd.f32 %v957, %v958
    %v960 = vtanh.pop %v959
    %v961 = vmul.f32 %v956, %v960
    %962 = vmatpush.msra.mxu0 %v517
    %963 = vmatpush.msra.mxu0 %v513
    %964 = vmatpush.msra.mxu0 %v509
    %965 = vmatpush.msra.mxu0 %v505
    %966 = vmatpush.msra.mxu0 %v501
    %967 = vmatpush.msra.mxu0 %v497
    %968 = vmatpush.msra.mxu0 %v493
    %969 = vmatpush.msra.mxu0 %v489
    %970 = vmatpush.msra.mxu0 %v485
    %971 = vmatpush.msra.mxu0 %v481
    %972 = vmatpush.msra.mxu0 %v477
    %973 = vmatpush.msra.mxu0 %v473
    %974 = vmatpush.msra.mxu0 %v469
    %975 = vmatpush.msra.mxu0 %v465
    %976 = vmatpush.msra.mxu0 %v461
    %977 = vmatpush.msra.mxu0 %v457
    %978 = vmatmul.f32.gmra.mxu0 %v961
    %v979 = vpop.f32.mrf.mxu0
    %v980 = vadd.f32 0.0, %v979
    %981 = vdwg.mxu0
    %982 = vmatpush.msra.mxu0 %v518
    %983 = vmatpush.msra.mxu0 %v514
    %984 = vmatpush.msra.mxu0 %v510
    %985 = vmatpush.msra.mxu0 %v506
    %986 = vmatpush.msra.mxu0 %v502
    %987 = vmatpush.msra.mxu0 %v498
    %988 = vmatpush.msra.mxu0 %v494
    %989 = vmatpush.msra.mxu0 %v490
    %990 = vmatpush.msra.mxu0 %v486
    %991 = vmatpush.msra.mxu0 %v482
    %992 = vmatpush.msra.mxu0 %v478
    %993 = vmatpush.msra.mxu0 %v474
    %994 = vmatpush.msra.mxu0 %v470
    %995 = vmatpush.msra.mxu0 %v466
    %996 = vmatpush.msra.mxu0 %v462
    %997 = vmatpush.msra.mxu0 %v458
    %998 = vmatmul.f32.gmra.mxu0 %v961
    %v999 = vpop.f32.mrf.mxu0
    %v1000 = vadd.f32 0.0, %v999
    %1001 = vdwg.mxu0
    %1002 = vmatpush.msra.mxu0 %v519
    %1003 = vmatpush.msra.mxu0 %v515
    %1004 = vmatpush.msra.mxu0 %v511
    %1005 = vmatpush.msra.mxu0 %v507
    %1006 = vmatpush.msra.mxu0 %v503
    %1007 = vmatpush.msra.mxu0 %v499
    %1008 = vmatpush.msra.mxu0 %v495
    %1009 = vmatpush.msra.mxu0 %v491
    %1010 = vmatpush.msra.mxu0 %v487
    %1011 = vmatpush.msra.mxu0 %v483
    %1012 = vmatpush.msra.mxu0 %v479
    %1013 = vmatpush.msra.mxu0 %v475
    %1014 = vmatpush.msra.mxu0 %v471
    %1015 = vmatpush.msra.mxu0 %v467
    %1016 = vmatpush.msra.mxu0 %v463
    %1017 = vmatpush.msra.mxu0 %v459
    %1018 = vmatmul.f32.gmra.mxu0 %v961
    %v1019 = vpop.f32.mrf.mxu0
    %v1020 = vadd.f32 0.0, %v1019
    %1021 = vdwg.mxu0
    %1022 = vmatpush.msra.mxu0 %v520
    %1023 = vmatpush.msra.mxu0 %v516
    %1024 = vmatpush.msra.mxu0 %v512
    %1025 = vmatpush.msra.mxu0 %v508
    %1026 = vmatpush.msra.mxu0 %v504
    %1027 = vmatpush.msra.mxu0 %v500
    %1028 = vmatpush.msra.mxu0 %v496
    %1029 = vmatpush.msra.mxu0 %v492
    %1030 = vmatpush.msra.mxu0 %v488
    %1031 = vmatpush.msra.mxu0 %v484
    %1032 = vmatpush.msra.mxu0 %v480
    %1033 = vmatpush.msra.mxu0 %v476
    %1034 = vmatpush.msra.mxu0 %v472
    %1035 = vmatpush.msra.mxu0 %v468
    %1036 = vmatpush.msra.mxu0 %v464
    %1037 = vmatpush.msra.mxu0 %v460
    %1038 = vmatmul.f32.gmra.mxu0 %v961
    %v1039 = vpop.f32.mrf.mxu0
    %v1040 = vadd.f32 0.0, %v1039
    %1041 = vdwg.mxu0
    %v1042 = vadd.f32 %v320, %v980
    %v1043 = vadd.f32 %v361, %v1000
    %v1044 = vadd.f32 %v402, %v1020
    %v1045 = vadd.f32 %v443, %v1040
    %v1046 = vxor.u32 %v1042, 2147483648
    %v1047 = vmul.f32 %v1046, 1.442695
    %v1048 = vpow.pop %v1047
    %v1049 = vadd.f32 %v1048, 1.0
    %v1050 = vrcp.pop %v1049
    %v1051 = vmul.f32 %v1049, %v1050
    %v1052 = vsub.f32 1.0, %v1051
    %v1053 = vmul.f32 %v1050, %v1052
    %v1054 = vadd.f32 %v1050, %v1053
    %vm1055 = vweird.f32 %v1049
    %vm1056 = vweird.f32 %v1050
    %vm1057 = vmor %vm1055, %vm1056
    %v1058 = vsel %vm1057, %v1050, %v1054
    %v1059 = vand.u32 2147483647, %v1049
    %vm1060 = vcmp.eq.f32.partialorder %v1059, 8.507059e+37
    %v1061 = vand.u32 %v1049, 2147483648
    %v1062 = vor.u32 1.1754944e-38, %v1061
    %v1063 = vsel %vm1060, %v1062, %v1058
    %v1064 = vmul.f32 1.0, %v1063
    %v1065 = vxor.u32 %v1043, 2147483648
    %v1066 = vmul.f32 %v1065, 1.442695
    %v1067 = vpow.pop %v1066
    %v1068 = vadd.f32 %v1067, 1.0
    %v1069 = vrcp.pop %v1068
    %v1070 = vmul.f32 %v1068, %v1069
    %v1071 = vsub.f32 1.0, %v1070
    %v1072 = vmul.f32 %v1069, %v1071
    %v1073 = vadd.f32 %v1069, %v1072
    %vm1074 = vweird.f32 %v1068
    %vm1075 = vweird.f32 %v1069
    %vm1076 = vmor %vm1074, %vm1075
    %v1077 = vsel %vm1076, %v1069, %v1073
    %v1078 = vand.u32 2147483647, %v1068
    %vm1079 = vcmp.eq.f32.partialorder %v1078, 8.507059e+37
    %v1080 = vand.u32 %v1068, 2147483648
    %v1081 = vor.u32 1.1754944e-38, %v1080
    %v1082 = vsel %vm1079, %v1081, %v1077
    %v1083 = vmul.f32 1.0, %v1082
    %v1084 = vtanh.pop %v1044
    %v1085 = vxor.u32 %v1045, 2147483648
    %v1086 = vmul.f32 %v1085, 1.442695
    %v1087 = vpow.pop %v1086
    %v1088 = vadd.f32 %v1087, 1.0
    %v1089 = vrcp.pop %v1088
    %v1090 = vmul.f32 %v1088, %v1089
    %v1091 = vsub.f32 1.0, %v1090
    %v1092 = vmul.f32 %v1089, %v1091
    %v1093 = vadd.f32 %v1089, %v1092
    %vm1094 = vweird.f32 %v1088
    %vm1095 = vweird.f32 %v1089
    %vm1096 = vmor %vm1094, %vm1095
    %v1097 = vsel %vm1096, %v1089, %v1093
    %v1098 = vand.u32 2147483647, %v1088
    %vm1099 = vcmp.eq.f32.partialorder %v1098, 8.507059e+37
    %v1100 = vand.u32 %v1088, 2147483648
    %v1101 = vor.u32 1.1754944e-38, %v1100
    %v1102 = vsel %vm1099, %v1101, %v1097
    %v1103 = vmul.f32 1.0, %v1102
    %v1104 = vmul.f32 %v1083, %v959
    %v1105 = vmul.f32 %v1064, %v1084
    %v1106 = vadd.f32 %v1104, %v1105
    %v1107 = vtanh.pop %v1106
    %v1108 = vmul.f32 %v1103, %v1107
    %1109 = vmatpush.msra.mxu0 %v517
    %1110 = vmatpush.msra.mxu0 %v513
    %1111 = vmatpush.msra.mxu0 %v509
    %1112 = vmatpush.msra.mxu0 %v505
    %1113 = vmatpush.msra.mxu0 %v501
    %1114 = vmatpush.msra.mxu0 %v497
    %1115 = vmatpush.msra.mxu0 %v493
    %1116 = vmatpush.msra.mxu0 %v489
    %1117 = vmatpush.msra.mxu0 %v485
    %1118 = vmatpush.msra.mxu0 %v481
    %1119 = vmatpush.msra.mxu0 %v477
    %1120 = vmatpush.msra.mxu0 %v473
    %1121 = vmatpush.msra.mxu0 %v469
    %1122 = vmatpush.msra.mxu0 %v465
    %1123 = vmatpush.msra.mxu0 %v461
    %1124 = vmatpush.msra.mxu0 %v457
    %1125 = vmatmul.f32.gmra.mxu0 %v1108
    %v1126 = vpop.f32.mrf.mxu0
    %v1127 = vadd.f32 0.0, %v1126
    %1128 = vdwg.mxu0
    %1129 = vmatpush.msra.mxu0 %v518
    %1130 = vmatpush.msra.mxu0 %v514
    %1131 = vmatpush.msra.mxu0 %v510
    %1132 = vmatpush.msra.mxu0 %v506
    %1133 = vmatpush.msra.mxu0 %v502
    %1134 = vmatpush.msra.mxu0 %v498
    %1135 = vmatpush.msra.mxu0 %v494
    %1136 = vmatpush.msra.mxu0 %v490
    %1137 = vmatpush.msra.mxu0 %v486
    %1138 = vmatpush.msra.mxu0 %v482
    %1139 = vmatpush.msra.mxu0 %v478
    %1140 = vmatpush.msra.mxu0 %v474
    %1141 = vmatpush.msra.mxu0 %v470
    %1142 = vmatpush.msra.mxu0 %v466
    %1143 = vmatpush.msra.mxu0 %v462
    %1144 = vmatpush.msra.mxu0 %v458
    %1145 = vmatmul.f32.gmra.mxu0 %v1108
    %v1146 = vpop.f32.mrf.mxu0
    %v1147 = vadd.f32 0.0, %v1146
    %1148 = vdwg.mxu0
    %1149 = vmatpush.msra.mxu0 %v519
    %1150 = vmatpush.msra.mxu0 %v515
    %1151 = vmatpush.msra.mxu0 %v511
    %1152 = vmatpush.msra.mxu0 %v507
    %1153 = vmatpush.msra.mxu0 %v503
    %1154 = vmatpush.msra.mxu0 %v499
    %1155 = vmatpush.msra.mxu0 %v495
    %1156 = vmatpush.msra.mxu0 %v491
    %1157 = vmatpush.msra.mxu0 %v487
    %1158 = vmatpush.msra.mxu0 %v483
    %1159 = vmatpush.msra.mxu0 %v479
    %1160 = vmatpush.msra.mxu0 %v475
    %1161 = vmatpush.msra.mxu0 %v471
    %1162 = vmatpush.msra.mxu0 %v467
    %1163 = vmatpush.msra.mxu0 %v463
    %1164 = vmatpush.msra.mxu0 %v459
    %1165 = vmatmul.f32.gmra.mxu0 %v1108
    %v1166 = vpop.f32.mrf.mxu0
    %v1167 = vadd.f32 0.0, %v1166
    %1168 = vdwg.mxu0
    %1169 = vmatpush.msra.mxu0 %v520
    %1170 = vmatpush.msra.mxu0 %v516
    %1171 = vmatpush.msra.mxu0 %v512
    %1172 = vmatpush.msra.mxu0 %v508
    %1173 = vmatpush.msra.mxu0 %v504
    %1174 = vmatpush.msra.mxu0 %v500
    %1175 = vmatpush.msra.mxu0 %v496
    %1176 = vmatpush.msra.mxu0 %v492
    %1177 = vmatpush.msra.mxu0 %v488
    %1178 = vmatpush.msra.mxu0 %v484
    %1179 = vmatpush.msra.mxu0 %v480
    %1180 = vmatpush.msra.mxu0 %v476
    %1181 = vmatpush.msra.mxu0 %v472
    %1182 = vmatpush.msra.mxu0 %v468
    %1183 = vmatpush.msra.mxu0 %v464
    %1184 = vmatpush.msra.mxu0 %v460
    %1185 = vmatmul.f32.gmra.mxu0 %v1108
    %v1186 = vpop.f32.mrf.mxu0
    %v1187 = vadd.f32 0.0, %v1186
    %1188 = vdwg.mxu0
    %v1189 = vadd.f32 %v323, %v1127
    %v1190 = vadd.f32 %v364, %v1147
    %v1191 = vadd.f32 %v405, %v1167
    %v1192 = vadd.f32 %v446, %v1187
    %v1193 = vxor.u32 %v1189, 2147483648
    %v1194 = vmul.f32 %v1193, 1.442695
    %v1195 = vpow.pop %v1194
    %v1196 = vadd.f32 %v1195, 1.0
    %v1197 = vrcp.pop %v1196
    %v1198 = vmul.f32 %v1196, %v1197
    %v1199 = vsub.f32 1.0, %v1198
    %v1200 = vmul.f32 %v1197, %v1199
    %v1201 = vadd.f32 %v1197, %v1200
    %vm1202 = vweird.f32 %v1196
    %vm1203 = vweird.f32 %v1197
    %vm1204 = vmor %vm1202, %vm1203
    %v1205 = vsel %vm1204, %v1197, %v1201
    %v1206 = vand.u32 2147483647, %v1196
    %vm1207 = vcmp.eq.f32.partialorder %v1206, 8.507059e+37
    %v1208 = vand.u32 %v1196, 2147483648
    %v1209 = vor.u32 1.1754944e-38, %v1208
    %v1210 = vsel %vm1207, %v1209, %v1205
    %v1211 = vmul.f32 1.0, %v1210
    %v1212 = vxor.u32 %v1190, 2147483648
    %v1213 = vmul.f32 %v1212, 1.442695
    %v1214 = vpow.pop %v1213
    %v1215 = vadd.f32 %v1214, 1.0
    %v1216 = vrcp.pop %v1215
    %v1217 = vmul.f32 %v1215, %v1216
    %v1218 = vsub.f32 1.0, %v1217
    %v1219 = vmul.f32 %v1216, %v1218
    %v1220 = vadd.f32 %v1216, %v1219
    %vm1221 = vweird.f32 %v1215
    %vm1222 = vweird.f32 %v1216
    %vm1223 = vmor %vm1221, %vm1222
    %v1224 = vsel %vm1223, %v1216, %v1220
    %v1225 = vand.u32 2147483647, %v1215
    %vm1226 = vcmp.eq.f32.partialorder %v1225, 8.507059e+37
    %v1227 = vand.u32 %v1215, 2147483648
    %v1228 = vor.u32 1.1754944e-38, %v1227
    %v1229 = vsel %vm1226, %v1228, %v1224
    %v1230 = vmul.f32 1.0, %v1229
    %v1231 = vtanh.pop %v1191
    %v1232 = vxor.u32 %v1192, 2147483648
    %v1233 = vmul.f32 %v1232, 1.442695
    %v1234 = vpow.pop %v1233
    %v1235 = vadd.f32 %v1234, 1.0
    %v1236 = vrcp.pop %v1235
    %v1237 = vmul.f32 %v1235, %v1236
    %v1238 = vsub.f32 1.0, %v1237
    %v1239 = vmul.f32 %v1236, %v1238
    %v1240 = vadd.f32 %v1236, %v1239
    %vm1241 = vweird.f32 %v1235
    %vm1242 = vweird.f32 %v1236
    %vm1243 = vmor %vm1241, %vm1242
    %v1244 = vsel %vm1243, %v1236, %v1240
    %v1245 = vand.u32 2147483647, %v1235
    %vm1246 = vcmp.eq.f32.partialorder %v1245, 8.507059e+37
    %v1247 = vand.u32 %v1235, 2147483648
    %v1248 = vor.u32 1.1754944e-38, %v1247
    %v1249 = vsel %vm1246, %v1248, %v1244
    %v1250 = vmul.f32 1.0, %v1249
    %v1251 = vmul.f32 %v1230, %v1106
    %v1252 = vmul.f32 %v1211, %v1231
    %v1253 = vadd.f32 %v1251, %v1252
    %v1254 = vtanh.pop %v1253
    %v1255 = vmul.f32 %v1250, %v1254
    %1256 = vmatpush.msra.mxu0 %v517
    %1257 = vmatpush.msra.mxu0 %v513
    %1258 = vmatpush.msra.mxu0 %v509
    %1259 = vmatpush.msra.mxu0 %v505
    %1260 = vmatpush.msra.mxu0 %v501
    %1261 = vmatpush.msra.mxu0 %v497
    %1262 = vmatpush.msra.mxu0 %v493
    %1263 = vmatpush.msra.mxu0 %v489
    %1264 = vmatpush.msra.mxu0 %v485
    %1265 = vmatpush.msra.mxu0 %v481
    %1266 = vmatpush.msra.mxu0 %v477
    %1267 = vmatpush.msra.mxu0 %v473
    %1268 = vmatpush.msra.mxu0 %v469
    %1269 = vmatpush.msra.mxu0 %v465
    %1270 = vmatpush.msra.mxu0 %v461
    %1271 = vmatpush.msra.mxu0 %v457
    %1272 = vmatmul.f32.gmra.mxu0 %v1255
    %v1273 = vpop.f32.mrf.mxu0
    %v1274 = vadd.f32 0.0, %v1273
    %1275 = vdwg.mxu0
    %1276 = vmatpush.msra.mxu0 %v518
    %1277 = vmatpush.msra.mxu0 %v514
    %1278 = vmatpush.msra.mxu0 %v510
    %1279 = vmatpush.msra.mxu0 %v506
    %1280 = vmatpush.msra.mxu0 %v502
    %1281 = vmatpush.msra.mxu0 %v498
    %1282 = vmatpush.msra.mxu0 %v494
    %1283 = vmatpush.msra.mxu0 %v490
    %1284 = vmatpush.msra.mxu0 %v486
    %1285 = vmatpush.msra.mxu0 %v482
    %1286 = vmatpush.msra.mxu0 %v478
    %1287 = vmatpush.msra.mxu0 %v474
    %1288 = vmatpush.msra.mxu0 %v470
    %1289 = vmatpush.msra.mxu0 %v466
    %1290 = vmatpush.msra.mxu0 %v462
    %1291 = vmatpush.msra.mxu0 %v458
    %1292 = vmatmul.f32.gmra.mxu0 %v1255
    %v1293 = vpop.f32.mrf.mxu0
    %v1294 = vadd.f32 0.0, %v1293
    %1295 = vdwg.mxu0
    %1296 = vmatpush.msra.mxu0 %v519
    %1297 = vmatpush.msra.mxu0 %v515
    %1298 = vmatpush.msra.mxu0 %v511
    %1299 = vmatpush.msra.mxu0 %v507
    %1300 = vmatpush.msra.mxu0 %v503
    %1301 = vmatpush.msra.mxu0 %v499
    %1302 = vmatpush.msra.mxu0 %v495
    %1303 = vmatpush.msra.mxu0 %v491
    %1304 = vmatpush.msra.mxu0 %v487
    %1305 = vmatpush.msra.mxu0 %v483
    %1306 = vmatpush.msra.mxu0 %v479
    %1307 = vmatpush.msra.mxu0 %v475
    %1308 = vmatpush.msra.mxu0 %v471
    %1309 = vmatpush.msra.mxu0 %v467
    %1310 = vmatpush.msra.mxu0 %v463
    %1311 = vmatpush.msra.mxu0 %v459
    %1312 = vmatmul.f32.gmra.mxu0 %v1255
    %v1313 = vpop.f32.mrf.mxu0
    %v1314 = vadd.f32 0.0, %v1313
    %1315 = vdwg.mxu0
    %1316 = vmatpush.msra.mxu0 %v520
    %1317 = vmatpush.msra.mxu0 %v516
    %1318 = vmatpush.msra.mxu0 %v512
    %1319 = vmatpush.msra.mxu0 %v508
    %1320 = vmatpush.msra.mxu0 %v504
    %1321 = vmatpush.msra.mxu0 %v500
    %1322 = vmatpush.msra.mxu0 %v496
    %1323 = vmatpush.msra.mxu0 %v492
    %1324 = vmatpush.msra.mxu0 %v488
    %1325 = vmatpush.msra.mxu0 %v484
    %1326 = vmatpush.msra.mxu0 %v480
    %1327 = vmatpush.msra.mxu0 %v476
    %1328 = vmatpush.msra.mxu0 %v472
    %1329 = vmatpush.msra.mxu0 %v468
    %1330 = vmatpush.msra.mxu0 %v464
    %1331 = vmatpush.msra.mxu0 %v460
    %1332 = vmatmul.f32.gmra.mxu0 %v1255
    %v1333 = vpop.f32.mrf.mxu0
    %v1334 = vadd.f32 0.0, %v1333
    %1335 = vdwg.mxu0
    %v1336 = vadd.f32 %v326, %v1274
    %v1337 = vadd.f32 %v367, %v1294
    %v1338 = vadd.f32 %v408, %v1314
    %v1339 = vadd.f32 %v449, %v1334
    %v1340 = vxor.u32 %v1336, 2147483648
    %v1341 = vmul.f32 %v1340, 1.442695
    %v1342 = vpow.pop %v1341
    %v1343 = vadd.f32 %v1342, 1.0
    %v1344 = vrcp.pop %v1343
    %v1345 = vmul.f32 %v1343, %v1344
    %v1346 = vsub.f32 1.0, %v1345
    %v1347 = vmul.f32 %v1344, %v1346
    %v1348 = vadd.f32 %v1344, %v1347
    %vm1349 = vweird.f32 %v1343
    %vm1350 = vweird.f32 %v1344
    %vm1351 = vmor %vm1349, %vm1350
    %v1352 = vsel %vm1351, %v1344, %v1348
    %v1353 = vand.u32 2147483647, %v1343
    %vm1354 = vcmp.eq.f32.partialorder %v1353, 8.507059e+37
    %v1355 = vand.u32 %v1343, 2147483648
    %v1356 = vor.u32 1.1754944e-38, %v1355
    %v1357 = vsel %vm1354, %v1356, %v1352
    %v1358 = vmul.f32 1.0, %v1357
    %v1359 = vxor.u32 %v1337, 2147483648
    %v1360 = vmul.f32 %v1359, 1.442695
    %v1361 = vpow.pop %v1360
    %v1362 = vadd.f32 %v1361, 1.0
    %v1363 = vrcp.pop %v1362
    %v1364 = vmul.f32 %v1362, %v1363
    %v1365 = vsub.f32 1.0, %v1364
    %v1366 = vmul.f32 %v1363, %v1365
    %v1367 = vadd.f32 %v1363, %v1366
    %vm1368 = vweird.f32 %v1362
    %vm1369 = vweird.f32 %v1363
    %vm1370 = vmor %vm1368, %vm1369
    %v1371 = vsel %vm1370, %v1363, %v1367
    %v1372 = vand.u32 2147483647, %v1362
    %vm1373 = vcmp.eq.f32.partialorder %v1372, 8.507059e+37
    %v1374 = vand.u32 %v1362, 2147483648
    %v1375 = vor.u32 1.1754944e-38, %v1374
    %v1376 = vsel %vm1373, %v1375, %v1371
    %v1377 = vmul.f32 1.0, %v1376
    %v1378 = vtanh.pop %v1338
    %v1379 = vxor.u32 %v1339, 2147483648
    %v1380 = vmul.f32 %v1379, 1.442695
    %v1381 = vpow.pop %v1380
    %v1382 = vadd.f32 %v1381, 1.0
    %v1383 = vrcp.pop %v1382
    %v1384 = vmul.f32 %v1382, %v1383
    %v1385 = vsub.f32 1.0, %v1384
    %v1386 = vmul.f32 %v1383, %v1385
    %v1387 = vadd.f32 %v1383, %v1386
    %vm1388 = vweird.f32 %v1382
    %vm1389 = vweird.f32 %v1383
    %vm1390 = vmor %vm1388, %vm1389
    %v1391 = vsel %vm1390, %v1383, %v1387
    %v1392 = vand.u32 2147483647, %v1382
    %vm1393 = vcmp.eq.f32.partialorder %v1392, 8.507059e+37
    %v1394 = vand.u32 %v1382, 2147483648
    %v1395 = vor.u32 1.1754944e-38, %v1394
    %v1396 = vsel %vm1393, %v1395, %v1391
    %v1397 = vmul.f32 1.0, %v1396
    %v1398 = vmul.f32 %v1377, %v1253
    %v1399 = vmul.f32 %v1358, %v1378
    %v1400 = vadd.f32 %v1398, %v1399
    %v1401 = vtanh.pop %v1400
    %v1402 = vmul.f32 %v1397, %v1401
    %1403 = vmatpush.msra.mxu0 %v517
    %1404 = vmatpush.msra.mxu0 %v513
    %1405 = vmatpush.msra.mxu0 %v509
    %1406 = vmatpush.msra.mxu0 %v505
    %1407 = vmatpush.msra.mxu0 %v501
    %1408 = vmatpush.msra.mxu0 %v497
    %1409 = vmatpush.msra.mxu0 %v493
    %1410 = vmatpush.msra.mxu0 %v489
    %1411 = vmatpush.msra.mxu0 %v485
    %1412 = vmatpush.msra.mxu0 %v481
    %1413 = vmatpush.msra.mxu0 %v477
    %1414 = vmatpush.msra.mxu0 %v473
    %1415 = vmatpush.msra.mxu0 %v469
    %1416 = vmatpush.msra.mxu0 %v465
    %1417 = vmatpush.msra.mxu0 %v461
    %1418 = vmatpush.msra.mxu0 %v457
    %1419 = vmatmul.f32.gmra.mxu0 %v1402
    %v1420 = vpop.f32.mrf.mxu0
    %v1421 = vadd.f32 0.0, %v1420
    %1422 = vdwg.mxu0
    %1423 = vmatpush.msra.mxu0 %v518
    %1424 = vmatpush.msra.mxu0 %v514
    %1425 = vmatpush.msra.mxu0 %v510
    %1426 = vmatpush.msra.mxu0 %v506
    %1427 = vmatpush.msra.mxu0 %v502
    %1428 = vmatpush.msra.mxu0 %v498
    %1429 = vmatpush.msra.mxu0 %v494
    %1430 = vmatpush.msra.mxu0 %v490
    %1431 = vmatpush.msra.mxu0 %v486
    %1432 = vmatpush.msra.mxu0 %v482
    %1433 = vmatpush.msra.mxu0 %v478
    %1434 = vmatpush.msra.mxu0 %v474
    %1435 = vmatpush.msra.mxu0 %v470
    %1436 = vmatpush.msra.mxu0 %v466
    %1437 = vmatpush.msra.mxu0 %v462
    %1438 = vmatpush.msra.mxu0 %v458
    %1439 = vmatmul.f32.gmra.mxu0 %v1402
    %v1440 = vpop.f32.mrf.mxu0
    %v1441 = vadd.f32 0.0, %v1440
    %1442 = vdwg.mxu0
    %1443 = vmatpush.msra.mxu0 %v519
    %1444 = vmatpush.msra.mxu0 %v515
    %1445 = vmatpush.msra.mxu0 %v511
    %1446 = vmatpush.msra.mxu0 %v507
    %1447 = vmatpush.msra.mxu0 %v503
    %1448 = vmatpush.msra.mxu0 %v499
    %1449 = vmatpush.msra.mxu0 %v495
    %1450 = vmatpush.msra.mxu0 %v491
    %1451 = vmatpush.msra.mxu0 %v487
    %1452 = vmatpush.msra.mxu0 %v483
    %1453 = vmatpush.msra.mxu0 %v479
    %1454 = vmatpush.msra.mxu0 %v475
    %1455 = vmatpush.msra.mxu0 %v471
    %1456 = vmatpush.msra.mxu0 %v467
    %1457 = vmatpush.msra.mxu0 %v463
    %1458 = vmatpush.msra.mxu0 %v459
    %1459 = vmatmul.f32.gmra.mxu0 %v1402
    %v1460 = vpop.f32.mrf.mxu0
    %v1461 = vadd.f32 0.0, %v1460
    %1462 = vdwg.mxu0
    %1463 = vmatpush.msra.mxu0 %v520
    %1464 = vmatpush.msra.mxu0 %v516
    %1465 = vmatpush.msra.mxu0 %v512
    %1466 = vmatpush.msra.mxu0 %v508
    %1467 = vmatpush.msra.mxu0 %v504
    %1468 = vmatpush.msra.mxu0 %v500
    %1469 = vmatpush.msra.mxu0 %v496
    %1470 = vmatpush.msra.mxu0 %v492
    %1471 = vmatpush.msra.mxu0 %v488
    %1472 = vmatpush.msra.mxu0 %v484
    %1473 = vmatpush.msra.mxu0 %v480
    %1474 = vmatpush.msra.mxu0 %v476
    %1475 = vmatpush.msra.mxu0 %v472
    %1476 = vmatpush.msra.mxu0 %v468
    %1477 = vmatpush.msra.mxu0 %v464
    %1478 = vmatpush.msra.mxu0 %v460
    %1479 = vmatmul.f32.gmra.mxu0 %v1402
    %v1480 = vpop.f32.mrf.mxu0
    %v1481 = vadd.f32 0.0, %v1480
    %1482 = vdwg.mxu0
    %v1483 = vadd.f32 %v329, %v1421
    %v1484 = vadd.f32 %v370, %v1441
    %v1485 = vadd.f32 %v411, %v1461
    %v1486 = vadd.f32 %v452, %v1481
    %v1487 = vxor.u32 %v1483, 2147483648
    %v1488 = vmul.f32 %v1487, 1.442695
    %v1489 = vpow.pop %v1488
    %v1490 = vadd.f32 %v1489, 1.0
    %v1491 = vrcp.pop %v1490
    %v1492 = vmul.f32 %v1490, %v1491
    %v1493 = vsub.f32 1.0, %v1492
    %v1494 = vmul.f32 %v1491, %v1493
    %v1495 = vadd.f32 %v1491, %v1494
    %vm1496 = vweird.f32 %v1490
    %vm1497 = vweird.f32 %v1491
    %vm1498 = vmor %vm1496, %vm1497
    %v1499 = vsel %vm1498, %v1491, %v1495
    %v1500 = vand.u32 2147483647, %v1490
    %vm1501 = vcmp.eq.f32.partialorder %v1500, 8.507059e+37
    %v1502 = vand.u32 %v1490, 2147483648
    %v1503 = vor.u32 1.1754944e-38, %v1502
    %v1504 = vsel %vm1501, %v1503, %v1499
    %v1505 = vmul.f32 1.0, %v1504
    %v1506 = vxor.u32 %v1484, 2147483648
    %v1507 = vmul.f32 %v1506, 1.442695
    %v1508 = vpow.pop %v1507
    %v1509 = vadd.f32 %v1508, 1.0
    %v1510 = vrcp.pop %v1509
    %v1511 = vmul.f32 %v1509, %v1510
    %v1512 = vsub.f32 1.0, %v1511
    %v1513 = vmul.f32 %v1510, %v1512
    %v1514 = vadd.f32 %v1510, %v1513
    %vm1515 = vweird.f32 %v1509
    %vm1516 = vweird.f32 %v1510
    %vm1517 = vmor %vm1515, %vm1516
    %v1518 = vsel %vm1517, %v1510, %v1514
    %v1519 = vand.u32 2147483647, %v1509
    %vm1520 = vcmp.eq.f32.partialorder %v1519, 8.507059e+37
    %v1521 = vand.u32 %v1509, 2147483648
    %v1522 = vor.u32 1.1754944e-38, %v1521
    %v1523 = vsel %vm1520, %v1522, %v1518
    %v1524 = vmul.f32 1.0, %v1523
    %v1525 = vtanh.pop %v1485
    %v1526 = vxor.u32 %v1486, 2147483648
    %v1527 = vmul.f32 %v1526, 1.442695
    %v1528 = vpow.pop %v1527
    %v1529 = vadd.f32 %v1528, 1.0
    %v1530 = vrcp.pop %v1529
    %v1531 = vmul.f32 %v1529, %v1530
    %v1532 = vsub.f32 1.0, %v1531
    %v1533 = vmul.f32 %v1530, %v1532
    %v1534 = vadd.f32 %v1530, %v1533
    %vm1535 = vweird.f32 %v1529
    %vm1536 = vweird.f32 %v1530
    %vm1537 = vmor %vm1535, %vm1536
    %v1538 = vsel %vm1537, %v1530, %v1534
    %v1539 = vand.u32 2147483647, %v1529
    %vm1540 = vcmp.eq.f32.partialorder %v1539, 8.507059e+37
    %v1541 = vand.u32 %v1529, 2147483648
    %v1542 = vor.u32 1.1754944e-38, %v1541
    %v1543 = vsel %vm1540, %v1542, %v1538
    %v1544 = vmul.f32 1.0, %v1543
    %v1545 = vmul.f32 %v1524, %v1400
    %v1546 = vmul.f32 %v1505, %v1525
    %v1547 = vadd.f32 %v1545, %v1546
    %v1548 = vtanh.pop %v1547
    %v1549 = vmul.f32 %v1544, %v1548
    %1550 = vmatpush.msra.mxu0 %v517
    %1551 = vmatpush.msra.mxu0 %v513
    %1552 = vmatpush.msra.mxu0 %v509
    %1553 = vmatpush.msra.mxu0 %v505
    %1554 = vmatpush.msra.mxu0 %v501
    %1555 = vmatpush.msra.mxu0 %v497
    %1556 = vmatpush.msra.mxu0 %v493
    %1557 = vmatpush.msra.mxu0 %v489
    %1558 = vmatpush.msra.mxu0 %v485
    %1559 = vmatpush.msra.mxu0 %v481
    %1560 = vmatpush.msra.mxu0 %v477
    %1561 = vmatpush.msra.mxu0 %v473
    %1562 = vmatpush.msra.mxu0 %v469
    %1563 = vmatpush.msra.mxu0 %v465
    %1564 = vmatpush.msra.mxu0 %v461
    %1565 = vmatpush.msra.mxu0 %v457
    %1566 = vmatmul.f32.gmra.mxu0 %v1549
    %v1567 = vpop.f32.mrf.mxu0
    %v1568 = vadd.f32 0.0, %v1567
    %1569 = vdwg.mxu0
    %1570 = vmatpush.msra.mxu0 %v518
    %1571 = vmatpush.msra.mxu0 %v514
    %1572 = vmatpush.msra.mxu0 %v510
    %1573 = vmatpush.msra.mxu0 %v506
    %1574 = vmatpush.msra.mxu0 %v502
    %1575 = vmatpush.msra.mxu0 %v498
    %1576 = vmatpush.msra.mxu0 %v494
    %1577 = vmatpush.msra.mxu0 %v490
    %1578 = vmatpush.msra.mxu0 %v486
    %1579 = vmatpush.msra.mxu0 %v482
    %1580 = vmatpush.msra.mxu0 %v478
    %1581 = vmatpush.msra.mxu0 %v474
    %1582 = vmatpush.msra.mxu0 %v470
    %1583 = vmatpush.msra.mxu0 %v466
    %1584 = vmatpush.msra.mxu0 %v462
    %1585 = vmatpush.msra.mxu0 %v458
    %1586 = vmatmul.f32.gmra.mxu0 %v1549
    %v1587 = vpop.f32.mrf.mxu0
    %v1588 = vadd.f32 0.0, %v1587
    %1589 = vdwg.mxu0
    %1590 = vmatpush.msra.mxu0 %v519
    %1591 = vmatpush.msra.mxu0 %v515
    %1592 = vmatpush.msra.mxu0 %v511
    %1593 = vmatpush.msra.mxu0 %v507
    %1594 = vmatpush.msra.mxu0 %v503
    %1595 = vmatpush.msra.mxu0 %v499
    %1596 = vmatpush.msra.mxu0 %v495
    %1597 = vmatpush.msra.mxu0 %v491
    %1598 = vmatpush.msra.mxu0 %v487
    %1599 = vmatpush.msra.mxu0 %v483
    %1600 = vmatpush.msra.mxu0 %v479
    %1601 = vmatpush.msra.mxu0 %v475
    %1602 = vmatpush.msra.mxu0 %v471
    %1603 = vmatpush.msra.mxu0 %v467
    %1604 = vmatpush.msra.mxu0 %v463
    %1605 = vmatpush.msra.mxu0 %v459
    %1606 = vmatmul.f32.gmra.mxu0 %v1549
    %v1607 = vpop.f32.mrf.mxu0
    %v1608 = vadd.f32 0.0, %v1607
    %1609 = vdwg.mxu0
    %1610 = vmatpush.msra.mxu0 %v520
    %1611 = vmatpush.msra.mxu0 %v516
    %1612 = vmatpush.msra.mxu0 %v512
    %1613 = vmatpush.msra.mxu0 %v508
    %1614 = vmatpush.msra.mxu0 %v504
    %1615 = vmatpush.msra.mxu0 %v500
    %1616 = vmatpush.msra.mxu0 %v496
    %1617 = vmatpush.msra.mxu0 %v492
    %1618 = vmatpush.msra.mxu0 %v488
    %1619 = vmatpush.msra.mxu0 %v484
    %1620 = vmatpush.msra.mxu0 %v480
    %1621 = vmatpush.msra.mxu0 %v476
    %1622 = vmatpush.msra.mxu0 %v472
    %1623 = vmatpush.msra.mxu0 %v468
    %1624 = vmatpush.msra.mxu0 %v464
    %1625 = vmatpush.msra.mxu0 %v460
    %1626 = vmatmul.f32.gmra.mxu0 %v1549
    %v1627 = vpop.f32.mrf.mxu0
    %v1628 = vadd.f32 0.0, %v1627
    %1629 = vdwg.mxu0
    %v1630 = vadd.f32 %v332, %v1568
    %v1631 = vadd.f32 %v373, %v1588
    %v1632 = vadd.f32 %v414, %v1608
    %v1633 = vadd.f32 %v455, %v1628
    %v1634 = vxor.u32 %v1630, 2147483648
    %v1635 = vmul.f32 %v1634, 1.442695
    %v1636 = vpow.pop %v1635
    %v1637 = vadd.f32 %v1636, 1.0
    %v1638 = vrcp.pop %v1637
    %v1639 = vmul.f32 %v1637, %v1638
    %v1640 = vsub.f32 1.0, %v1639
    %v1641 = vmul.f32 %v1638, %v1640
    %v1642 = vadd.f32 %v1638, %v1641
    %vm1643 = vweird.f32 %v1637
    %vm1644 = vweird.f32 %v1638
    %vm1645 = vmor %vm1643, %vm1644
    %v1646 = vsel %vm1645, %v1638, %v1642
    %v1647 = vand.u32 2147483647, %v1637
    %vm1648 = vcmp.eq.f32.partialorder %v1647, 8.507059e+37
    %v1649 = vand.u32 %v1637, 2147483648
    %v1650 = vor.u32 1.1754944e-38, %v1649
    %v1651 = vsel %vm1648, %v1650, %v1646
    %v1652 = vmul.f32 1.0, %v1651
    %v1653 = vxor.u32 %v1631, 2147483648
    %v1654 = vmul.f32 %v1653, 1.442695
    %v1655 = vpow.pop %v1654
    %v1656 = vadd.f32 %v1655, 1.0
    %v1657 = vrcp.pop %v1656
    %v1658 = vmul.f32 %v1656, %v1657
    %v1659 = vsub.f32 1.0, %v1658
    %v1660 = vmul.f32 %v1657, %v1659
    %v1661 = vadd.f32 %v1657, %v1660
    %vm1662 = vweird.f32 %v1656
    %vm1663 = vweird.f32 %v1657
    %vm1664 = vmor %vm1662, %vm1663
    %v1665 = vsel %vm1664, %v1657, %v1661
    %v1666 = vand.u32 2147483647, %v1656
    %vm1667 = vcmp.eq.f32.partialorder %v1666, 8.507059e+37
    %v1668 = vand.u32 %v1656, 2147483648
    %v1669 = vor.u32 1.1754944e-38, %v1668
    %v1670 = vsel %vm1667, %v1669, %v1665
    %v1671 = vmul.f32 1.0, %v1670
    %v1672 = vtanh.pop %v1632
    %v1673 = vxor.u32 %v1633, 2147483648
    %v1674 = vmul.f32 %v1673, 1.442695
    %v1675 = vpow.pop %v1674
    %v1676 = vadd.f32 %v1675, 1.0
    %v1677 = vrcp.pop %v1676
    %v1678 = vmul.f32 %v1676, %v1677
    %v1679 = vsub.f32 1.0, %v1678
    %v1680 = vmul.f32 %v1677, %v1679
    %v1681 = vadd.f32 %v1677, %v1680
    %vm1682 = vweird.f32 %v1676
    %vm1683 = vweird.f32 %v1677
    %vm1684 = vmor %vm1682, %vm1683
    %v1685 = vsel %vm1684, %v1677, %v1681
    %v1686 = vand.u32 2147483647, %v1676
    %vm1687 = vcmp.eq.f32.partialorder %v1686, 8.507059e+37
    %v1688 = vand.u32 %v1676, 2147483648
    %v1689 = vor.u32 1.1754944e-38, %v1688
    %v1690 = vsel %vm1687, %v1689, %v1685
    %v1691 = vmul.f32 1.0, %v1690
    %v1692 = vmul.f32 %v1671, %v1547
    %v1693 = vmul.f32 %v1652, %v1672
    %v1694 = vadd.f32 %v1692, %v1693
    %v1695 = vtanh.pop %v1694
    %v1696 = vmul.f32 %v1691, %v1695
    %v1697 = vld [vmem:[%s9] sm:$0xff]
    %v1698 = vld [vmem:[%s9 + $0x8] sm:$0xff]
    %v1699 = vld [vmem:[%s9 + $0x10] sm:$0xff]
    %v1700 = vld [vmem:[%s9 + $0x18] sm:$0xff]
    %v1701 = vld [vmem:[%s9 + $0x20] sm:$0xff]
    %v1702 = vld [vmem:[%s9 + $0x28] sm:$0xff]
    %v1703 = vld [vmem:[%s9 + $0x30] sm:$0xff]
    %v1704 = vld [vmem:[%s9 + $0x38] sm:$0xff]
    %v1705 = vld [vmem:[%s9 + $0x40] sm:$0xff]
    %v1706 = vld [vmem:[%s9 + $0x48] sm:$0xff]
    %v1707 = vld [vmem:[%s9 + $0x50] sm:$0xff]
    %v1708 = vld [vmem:[%s9 + $0x58] sm:$0xff]
    %v1709 = vld [vmem:[%s9 + $0x60] sm:$0xff]
    %v1710 = vld [vmem:[%s9 + $0x68] sm:$0xff]
    %v1711 = vld [vmem:[%s9 + $0x70] sm:$0xff]
    %v1712 = vld [vmem:[%s9 + $0x78] sm:$0xff]
    %v1713 = vld [vmem:[%s10] sm:$0x1]
    %v1715 = vperm.slane %v1713, 0
    %1717 = vmatpush.msra.mxu0 %v1712
    %1718 = vmatpush.msra.mxu0 %v1711
    %1719 = vmatpush.msra.mxu0 %v1710
    %1720 = vmatpush.msra.mxu0 %v1709
    %1721 = vmatpush.msra.mxu0 %v1708
    %1722 = vmatpush.msra.mxu0 %v1707
    %1723 = vmatpush.msra.mxu0 %v1706
    %1724 = vmatpush.msra.mxu0 %v1705
    %1725 = vmatpush.msra.mxu0 %v1704
    %1726 = vmatpush.msra.mxu0 %v1703
    %1727 = vmatpush.msra.mxu0 %v1702
    %1728 = vmatpush.msra.mxu0 %v1701
    %1729 = vmatpush.msra.mxu0 %v1700
    %1730 = vmatpush.msra.mxu0 %v1699
    %1731 = vmatpush.msra.mxu0 %v1698
    %1732 = vmatpush.msra.mxu0 %v1697
    %1733 = vmatmul.f32.gmra.mxu0 %v1696
    %v1734 = vpop.f32.mrf.mxu0
    %v1735 = vadd.f32 %v1715, %v1734
    %1736 = vdwg.mxu0
    %v1737 = vmul.f32 %v1735, 0.2
    %v1738 = vsel %vm106, %v1737, -inf
    %1739 = vmax.xlane.f32.xlu0 %v1738
    %v1740 = vpop.xlane.xlu0 %1739
    %v1741 = vsub.f32 %v1737, %v1740
    %v1742 = vmul.f32 %v1741, 1.442695
    %v1743 = vpow.pop %v1742
    %v1744 = vsel %vm106, %v1743, 0.0
    %1745 = vadd.xlane.f32.xlu0 %v1744
    %v1746 = vpop.xlane.xlu0 %1745
    %v1747 = vrcp.pop %v1746
    %v1748 = vmul.f32 %v1743, %v1747
    %v1749 = vld [vmem:[%s1] sm:$0xff]
    %v1750 = vld [vmem:[%s11] sm:$0xf]
    %v1751 = vld [vmem:[%s12] sm:$0xf]
    %v1753 = vsel %vm106, %v1748, 0
    %v1756 = vsel %vm110, %v1751, 0
    %1758 = vmatpush.msra.mxu0 0.0
    %1759 = vmatpush.msra.mxu0 0.0
    %1760 = vmatpush.msra.mxu0 0.0
    %1761 = vmatpush.msra.mxu0 0.0
    %1762 = vmatpush.msra.mxu0 0.0
    %1763 = vmatpush.msra.mxu0 0.0
    %1764 = vmatpush.msra.mxu0 0.0
    %1765 = vmatpush.msra.mxu0 0.0
    %1766 = vmatpush.msra.mxu0 0.0
    %1767 = vmatpush.msra.mxu0 0.0
    %1768 = vmatpush.msra.mxu0 0.0
    %1769 = vmatpush.msra.mxu0 0.0
    %1770 = vmatpush.msra.mxu0 0.0
    %1771 = vmatpush.msra.mxu0 0.0
    %1772 = vmatpush.msra.mxu0 0.0
    %1773 = vmatpush.msra.mxu0 %v1756
    %1774 = vmatmul.f32.gmra.mxu0 %v1753
    %v1775 = vpop.f32.mrf.mxu0
    %v1776 = vadd.f32 0.0, %v1775
    %1777 = vdwg.mxu0
    %v1779 = vsel %vm106, %v1749, 0
    %v1782 = vsel %vm110, %v1750, 0
    %1784 = vmatpush.msra.mxu0 0.0
    %1785 = vmatpush.msra.mxu0 0.0
    %1786 = vmatpush.msra.mxu0 0.0
    %1787 = vmatpush.msra.mxu0 0.0
    %1788 = vmatpush.msra.mxu0 0.0
    %1789 = vmatpush.msra.mxu0 0.0
    %1790 = vmatpush.msra.mxu0 0.0
    %1791 = vmatpush.msra.mxu0 0.0
    %1792 = vmatpush.msra.mxu0 0.0
    %1793 = vmatpush.msra.mxu0 0.0
    %1794 = vmatpush.msra.mxu0 0.0
    %1795 = vmatpush.msra.mxu0 0.0
    %1796 = vmatpush.msra.mxu0 0.0
    %1797 = vmatpush.msra.mxu0 0.0
    %1798 = vmatpush.msra.mxu0 0.0
    %1799 = vmatpush.msra.mxu0 %v1782
    %1800 = vmatmul.f32.gmra.mxu0 %v1779
    %v1801 = vpop.f32.mrf.mxu0
    %v1802 = vadd.f32 %v1776, %v1801
    %1803 = vdwg.mxu0
    %v1804 = vld [vmem:[%s13] sm:$0x1]
    %v1806 = vperm.slane %v1804, 0
    %v1808 = vadd.f32 %v1802, %v1806
    %v1809 = vtanh.pop %v1808
    %v1810 = vld [vmem:[%s14] sm:$0xff]
    %v1811 = vld [vmem:[%s14 + $0x8] sm:$0xff]
    %v1812 = vld [vmem:[%s14 + $0x10] sm:$0xff]
    %v1813 = vld [vmem:[%s14 + $0x18] sm:$0xff]
    %v1814 = vld [vmem:[%s14 + $0x20] sm:$0xff]
    %v1815 = vld [vmem:[%s14 + $0x28] sm:$0xff]
    %v1816 = vld [vmem:[%s14 + $0x30] sm:$0xff]
    %v1817 = vld [vmem:[%s14 + $0x38] sm:$0xff]
    %v1818 = vld [vmem:[%s14 + $0x40] sm:$0xff]
    %v1819 = vld [vmem:[%s14 + $0x48] sm:$0xff]
    %v1820 = vld [vmem:[%s14 + $0x50] sm:$0xff]
    %v1821 = vld [vmem:[%s14 + $0x58] sm:$0xff]
    %v1822 = vld [vmem:[%s14 + $0x60] sm:$0xff]
    %v1823 = vld [vmem:[%s14 + $0x68] sm:$0xff]
    %v1824 = vld [vmem:[%s14 + $0x70] sm:$0xff]
    %v1825 = vld [vmem:[%s14 + $0x78] sm:$0xff]
    %v1826 = vld [vmem:[%s15] sm:$0x1]
    %v1828 = vperm.slane %v1826, 0
    %1830 = vmatpush.msra.mxu0 %v1825
    %1831 = vmatpush.msra.mxu0 %v1824
    %1832 = vmatpush.msra.mxu0 %v1823
    %1833 = vmatpush.msra.mxu0 %v1822
    %1834 = vmatpush.msra.mxu0 %v1821
    %1835 = vmatpush.msra.mxu0 %v1820
    %1836 = vmatpush.msra.mxu0 %v1819
    %1837 = vmatpush.msra.mxu0 %v1818
    %1838 = vmatpush.msra.mxu0 %v1817
    %1839 = vmatpush.msra.mxu0 %v1816
    %1840 = vmatpush.msra.mxu0 %v1815
    %1841 = vmatpush.msra.mxu0 %v1814
    %1842 = vmatpush.msra.mxu0 %v1813
    %1843 = vmatpush.msra.mxu0 %v1812
    %1844 = vmatpush.msra.mxu0 %v1811
    %1845 = vmatpush.msra.mxu0 %v1810
    %1846 = vmatmul.f32.gmra.mxu0 %v1809
    %v1847 = vpop.f32.mrf.mxu0
    %v1848 = vadd.f32 %v1828, %v1847
    %1849 = vdwg.mxu0
    %v1850 = vtanh.pop %v1848
    %v1851 = vld [vmem:[%s16] sm:$0xff]
    %v1852 = vld [vmem:[%s16 + $0x8] sm:$0xff]
    %v1853 = vld [vmem:[%s16 + $0x10] sm:$0xff]
    %v1854 = vld [vmem:[%s16 + $0x18] sm:$0xff]
    %v1855 = vld [vmem:[%s16 + $0x20] sm:$0xff]
    %v1856 = vld [vmem:[%s16 + $0x28] sm:$0xff]
    %v1857 = vld [vmem:[%s16 + $0x30] sm:$0xff]
    %v1858 = vld [vmem:[%s16 + $0x38] sm:$0xff]
    %v1859 = vld [vmem:[%s16 + $0x40] sm:$0xff]
    %v1860 = vld [vmem:[%s16 + $0x48] sm:$0xff]
    %v1861 = vld [vmem:[%s16 + $0x50] sm:$0xff]
    %v1862 = vld [vmem:[%s16 + $0x58] sm:$0xff]
    %v1863 = vld [vmem:[%s16 + $0x60] sm:$0xff]
    %v1864 = vld [vmem:[%s16 + $0x68] sm:$0xff]
    %v1865 = vld [vmem:[%s16 + $0x70] sm:$0xff]
    %v1866 = vld [vmem:[%s16 + $0x78] sm:$0xff]
    %v1867 = vld [vmem:[%s17] sm:$0x1]
    %v1869 = vperm.slane %v1867, 0
    %1871 = vmatpush.msra.mxu0 %v1866
    %1872 = vmatpush.msra.mxu0 %v1865
    %1873 = vmatpush.msra.mxu0 %v1864
    %1874 = vmatpush.msra.mxu0 %v1863
    %1875 = vmatpush.msra.mxu0 %v1862
    %1876 = vmatpush.msra.mxu0 %v1861
    %1877 = vmatpush.msra.mxu0 %v1860
    %1878 = vmatpush.msra.mxu0 %v1859
    %1879 = vmatpush.msra.mxu0 %v1858
    %1880 = vmatpush.msra.mxu0 %v1857
    %1881 = vmatpush.msra.mxu0 %v1856
    %1882 = vmatpush.msra.mxu0 %v1855
    %1883 = vmatpush.msra.mxu0 %v1854
    %1884 = vmatpush.msra.mxu0 %v1853
    %1885 = vmatpush.msra.mxu0 %v1852
    %1886 = vmatpush.msra.mxu0 %v1851
    %1887 = vmatmul.f32.gmra.mxu0 %v1850
    %v1888 = vpop.f32.mrf.mxu0
    %v1889 = vadd.f32 %v1869, %v1888
    %1890 = vdwg.mxu0
    %1892 = vrot.lane.b32.xlu0 %v1735, 2
    %v1893 = vpop.permute.xlu0 %1892
    %vm1895 = vcmask 15360
    %v1896 = vsel %vm1895, %v1889, %v1893
    %vm1897 = vcmask 48128
    %v1898 = vsel %vm1897, %v1896, 0.0
    %1899 = vst [vmem:[#allocation7] sm:$0xff] %v1898
    // Predicated region
    $region82: #{tpu_custom_call.1} parent=1 // pred_check
      _
    $region83: #{tpu_custom_call.1} parent=1 // pred_check_branch
      %1901 = sbr.rel (0) target = $region85
    $region84: #{tpu_custom_call.1} parent=1 // pred_region
      %1903 = vsyncadd [#allocation4], 0
      %s1905 = sshll.u32 [#allocation7], 4
      %s1906 = int_to_ptr.vmem [resolvable:$true] %s1905
      %s1907 = sshll.u32 %s18, 4
      %s1908 = int_to_ptr.hbm [resolvable:$true] %s1907
      %1910 = dma.vmem_to_hbm [thread:$0]  %s1906, 128, %s1908, [#allocation4]
    $region85: #{tpu_custom_call.1} parent=1 // pred_fallthru
      _
    // Predicated region
    $region86: #{tpu_custom_call.1} parent=1 // pred_check
      _
    $region87: #{tpu_custom_call.1} parent=1 // pred_check_branch
      %1912 = sbr.rel (0) target = $region89
    $region88: #{tpu_custom_call.1} parent=1 // pred_region
      %1914 = dma.done [#allocation4], 128
    $region89: #{tpu_custom_call.1} parent=1 // pred_fallthru
      _
    %1915 = vsyncpa [#allocation3], 1
    %1916 = vsyncpa [#allocation6], 1
    %1917 = vsyncpa [#allocation4], 1

</llo_original>
